<compile_context>
chip_gen: v7x
topology: tpu7x:2x2x1
jax: 0.10.0
libtpu: 0.0.40
codegen_flags: <defaults>
</compile_context>

<pallas_src>
import jax
import jax.numpy as jnp
import numpy as np
from jax.experimental import pallas as pl
from jax.experimental.pallas import tpu as pltpu


def _make_fused_resnet_block_kernel(num_layers, C, H, W, pad):
    """Fused kernel: for one batch element, run all conv3x3+ReLU layers and the residual add."""
    HW = H * W

    def kernel(x_ref, w_ref, b_ref, m_ref, o_ref, xpad_ref):
        # x_ref  : (1, C, HW)        this batch element; channels on sublanes, flat spatial on lanes
        # w_ref  : (L*9, C, C)       per (layer, dh, dw) weights, already transposed to (Cout, Cin)
        # b_ref  : (L, C, 1)         biases
        # m_ref  : (2, C, HW)        edge masks: [0] kills w==0 (dw=0 taps), [1] kills w==W-1 (dw=2)
        # o_ref  : (1, C, HW)
        # xpad_ref: VMEM (C, pad+HW+pad) f32 staging buffer; the zero halo on both sides supplies
        #           the out-of-image rows of every 3x3 tap (no jnp.pad, no HBM traffic).
        x0 = x_ref[0].astype(jnp.float32)              # residual input, (C, HW)
        mask_l = m_ref[0]                              # (C, HW) f32
        mask_r = m_ref[1]

        # Zero the staging buffer once; the halo stays zero, the interior is rewritten per layer.
        xpad_ref[...] = jnp.zeros_like(xpad_ref)

        cur = x0
        for layer in range(num_layers):
            xpad_ref[:, pad:pad + HW] = cur
            # Accumulator initialized with the broadcast bias (one broadcast per layer, hoisted
            # out of the tap loop).
            acc = jnp.broadcast_to(b_ref[layer].astype(jnp.float32), (C, HW))
            for dh in range(3):
                for dw in range(3):
                    # Flat-index offset of this tap; the shifted slice is a contiguous lane
                    # window of the padded buffer (no reshape, no relayout copy).
                    off = (dh - 1) * W + (dw - 1)
                    slab = xpad_ref[:, pad + off:pad + off + HW]     # (Cin, HW)
                    if dw == 0:
                        slab = slab * mask_l          # left column reads neighbouring row: zero it
                    elif dw == 2:
                        slab = slab * mask_r          # right column ditto
                    # Lane-dense matmul: (Cout, Cin) @ (Cin, HW) -> (Cout, HW), f32 accumulate.
                    acc = acc + jnp.dot(w_ref[layer * 9 + dh * 3 + dw], slab,
                                        preferred_element_type=jnp.float32)
            cur = jnp.maximum(acc, 0.0)                # ReLU

        o_ref[0] = (x0 + cur).astype(o_ref.dtype)      # out = x + residuals(x)

    return kernel


def resnet_block_forward(x_nchw, weights, biases):
    """out = x + Sequential([Conv3x3(same) + ReLU] * num_layers)(x), one fused Pallas kernel.

    x_nchw:  (N, C, H, W) float32 (PyTorch layout)
    weights: list of num_layers arrays, each (3, 3, Cin, Cout) (HWIO)
    biases:  list of num_layers arrays, each (Cout,)
    """
    N, C, H, W = x_nchw.shape
    L = len(weights)
    HW = H * W
    pad = 128                                     # lane-tile aligned halo; must be >= W + 1
    assert W + 1 <= pad, "kernel assumes the 3x3 halo offsets fit inside one 128-lane pad"

    # (L,3,3,Cin,Cout) -> (L*9, Cout, Cin): kernel computes W^T @ X with no in-kernel transpose.
    w_all = jnp.transpose(jnp.stack(weights), (0, 1, 2, 4, 3)).reshape(L * 9, C, C)
    b_all = jnp.stack(biases).reshape(L, C, 1)

    # Precomputed column-edge masks (only the dw=0 / dw=2 taps can wrap into a neighbouring row).
    col = np.arange(HW) % W
    m_np = np.ones((2, C, HW), np.float32)
    m_np[0] *= (col != 0).astype(np.float32)[None, :]
    m_np[1] *= (col != W - 1).astype(np.float32)[None, :]
    masks = jnp.asarray(m_np)

    x_flat = x_nchw.reshape(N, C, HW)             # channels on sublanes, spatial flat on lanes

    out = pl.pallas_call(
        _make_fused_resnet_block_kernel(L, C, H, W, pad),
        out_shape=jax.ShapeDtypeStruct((N, C, HW), x_nchw.dtype),
        grid=(N,),
        in_specs=[
            pl.BlockSpec((1, C, HW), lambda n: (n, 0, 0)),
            pl.BlockSpec((L * 9, C, C), lambda n: (0, 0, 0)),
            pl.BlockSpec((L, C, 1), lambda n: (0, 0, 0)),
            pl.BlockSpec((2, C, HW), lambda n: (0, 0, 0)),
        ],
        out_specs=pl.BlockSpec((1, C, HW), lambda n: (n, 0, 0)),
        scratch_shapes=[pltpu.VMEM((C, pad + HW + pad), jnp.float32)],
        compiler_params=pltpu.CompilerParams(
            dimension_semantics=("parallel",),    # batch axis: both v7x TensorCores stay busy
        ),
    )(x_flat, w_all, b_all, masks)
    return out.reshape(N, C, H, W)


def reference_forward(x_nchw, weights, biases):
    out = x_nchw
    for w, b in zip(weights, biases):
        out = jax.lax.conv_general_dilated(
            out, w, window_strides=(1, 1), padding="SAME",
            dimension_numbers=("NCHW", "HWIO", "NCHW"),
        ) + b.reshape(1, -1, 1, 1)
        out = jnp.maximum(out, 0.0)
    return x_nchw + out


if __name__ == "__main__":
    # Small shapes consistent with the module: batch=2, num_features=4, 16x16 spatial, 2 layers.
    N, C, H, W = 2, 4, 16, 16
    num_layers = 2

    key = jax.random.PRNGKey(0)
    kx, *kws = jax.random.split(key, 1 + 2 * num_layers)

    x = jax.random.normal(kx, (N, C, H, W), dtype=jnp.float32)   # NCHW, like the PyTorch module

    # Deterministic synthetic params, kaiming-uniform-ish bound like nn.Conv2d default.
    fan_in = C * 3 * 3
    bound = 1.0 / np.sqrt(fan_in)
    weights, biases = [], []
    for i in range(num_layers):
        weights.append(
            jax.random.uniform(kws[2 * i], (3, 3, C, C), jnp.float32, -bound, bound)
        )
        biases.append(
            jax.random.uniform(kws[2 * i + 1], (C,), jnp.float32, -bound, bound)
        )

    out = jax.block_until_ready(resnet_block_forward(x, weights, biases))
    ref = jax.block_until_ready(reference_forward(x, weights, biases))

    assert out.shape == (N, C, H, W) and out.dtype == jnp.float32
    np.testing.assert_allclose(np.asarray(out), np.asarray(ref), rtol=1e-4, atol=1e-4)

    print("KERNEL_OK")
</pallas_src>

<mosaic_0001>
module attributes {stable_mosaic.version = 11 : i64} {
  func.func @kernel(%arg0: i32, %arg1: memref<1x4x256xf32, #tpu.memory_space<vmem>>, %arg2: memref<18x4x4xf32, #tpu.memory_space<vmem>>, %arg3: memref<2x4x1xf32, #tpu.memory_space<vmem>>, %arg4: memref<2x4x256xf32, #tpu.memory_space<vmem>>, %arg5: memref<1x4x256xf32, #tpu.memory_space<vmem>>, %arg6: memref<4x512xf32, #tpu.memory_space<vmem>>) attributes {dimension_semantics = [#tpu.dimension_semantics<parallel>], iteration_bounds = array<i64: 2>, scalar_prefetch = 0 : i64, scratch_operands = 1 : i64, tpu.core_type = #tpu.core_type<tc>, window_params = [{transform_indices = @transform_0, window_bounds = array<i64: 1, 4, 256>}, {pipeline_mode = #tpu.pipeline_mode<synchronous>, transform_indices = @transform_1, window_bounds = array<i64: 18, 4, 4>}, {pipeline_mode = #tpu.pipeline_mode<synchronous>, transform_indices = @transform_2, window_bounds = array<i64: 2, 4, 1>}, {pipeline_mode = #tpu.pipeline_mode<synchronous>, transform_indices = @transform_3, window_bounds = array<i64: 2, 4, 256>}, {transform_indices = @transform_4, window_bounds = array<i64: 1, 4, 256>}]} {
    %c0 = arith.constant 0 : index
    %c0_0 = arith.constant 0 : index
    %c0_1 = arith.constant 0 : index
    %0 = vector.load %arg1[%c0, %c0_0, %c0_1] : memref<1x4x256xf32, #tpu.memory_space<vmem>>, vector<1x4x256xf32>
    %1 = vector.shape_cast %0 : vector<1x4x256xf32> to vector<4x256xf32>
    %c0_2 = arith.constant 0 : index
    %c0_3 = arith.constant 0 : index
    %c0_4 = arith.constant 0 : index
    %2 = vector.load %arg4[%c0_2, %c0_3, %c0_4] : memref<2x4x256xf32, #tpu.memory_space<vmem>>, vector<1x4x256xf32>
    %3 = vector.shape_cast %2 : vector<1x4x256xf32> to vector<4x256xf32>
    %c1 = arith.constant 1 : index
    %c0_5 = arith.constant 0 : index
    %c0_6 = arith.constant 0 : index
    %4 = vector.load %arg4[%c1, %c0_5, %c0_6] : memref<2x4x256xf32, #tpu.memory_space<vmem>>, vector<1x4x256xf32>
    %5 = vector.shape_cast %4 : vector<1x4x256xf32> to vector<4x256xf32>
    %cst = arith.constant 0.000000e+00 : f32
    %6 = vector.broadcast %cst : f32 to vector<4x512xf32>
    %c0_7 = arith.constant 0 : index
    %c0_8 = arith.constant 0 : index
    %7 = vector.load %arg6[%c0_7, %c0_8] : memref<4x512xf32, #tpu.memory_space<vmem>>, vector<4x512xf32>
    tpu.vector_store %arg6[%c0_7, %c0_8], %6 {strides = array<i32>} : memref<4x512xf32, #tpu.memory_space<vmem>>, vector<4x512xf32>,
    %c0_9 = arith.constant 0 : index
    %c128 = arith.constant 128 : index
    %8 = vector.load %arg6[%c0_9, %c128] : memref<4x512xf32, #tpu.memory_space<vmem>>, vector<4x256xf32>
    tpu.vector_store %arg6[%c0_9, %c128], %1 {strides = array<i32>} : memref<4x512xf32, #tpu.memory_space<vmem>>, vector<4x256xf32>,
    %c0_10 = arith.constant 0 : index
    %c0_11 = arith.constant 0 : index
    %c0_12 = arith.constant 0 : index
    %9 = vector.load %arg3[%c0_10, %c0_11, %c0_12] : memref<2x4x1xf32, #tpu.memory_space<vmem>>, vector<1x4x1xf32>
    %10 = vector.shape_cast %9 : vector<1x4x1xf32> to vector<4x1xf32>
    %11 = vector.shape_cast %10 : vector<4x1xf32> to vector<4x1xf32>
    %12 = vector.broadcast %11 : vector<4x1xf32> to vector<4x256xf32>
    %c0_13 = arith.constant 0 : index
    %c111 = arith.constant 111 : index
    %13 = vector.load %arg6[%c0_13, %c111] : memref<4x512xf32, #tpu.memory_space<vmem>>, vector<4x256xf32>
    %14 = arith.mulf %13, %3 : vector<4x256xf32>
    %c0_14 = arith.constant 0 : index
    %c0_15 = arith.constant 0 : index
    %c0_16 = arith.constant 0 : index
    %15 = vector.load %arg2[%c0_14, %c0_15, %c0_16] : memref<18x4x4xf32, #tpu.memory_space<vmem>>, vector<1x4x4xf32>
    %16 = vector.shape_cast %15 : vector<1x4x4xf32> to vector<4x4xf32>
    %cst_17 = arith.constant dense<0.000000e+00> : vector<4x256xf32>
    %17 = tpu.matmul %16, %14, %cst_17 {dimension_numbers = #tpu.dot_dimension_numbers<[1], [0], [0], [1], [0, 0, 1, 1], [], []>} : vector<4x4xf32>, vector<4x256xf32>, vector<4x256xf32> -> vector<4x256xf32>
    %18 = arith.addf %12, %17 : vector<4x256xf32>
    %c0_18 = arith.constant 0 : index
    %c112 = arith.constant 112 : index
    %19 = vector.load %arg6[%c0_18, %c112] : memref<4x512xf32, #tpu.memory_space<vmem>>, vector<4x256xf32>
    %c1_19 = arith.constant 1 : index
    %c0_20 = arith.constant 0 : index
    %c0_21 = arith.constant 0 : index
    %20 = vector.load %arg2[%c1_19, %c0_20, %c0_21] : memref<18x4x4xf32, #tpu.memory_space<vmem>>, vector<1x4x4xf32>
    %21 = vector.shape_cast %20 : vector<1x4x4xf32> to vector<4x4xf32>
    %cst_22 = arith.constant dense<0.000000e+00> : vector<4x256xf32>
    %22 = tpu.matmul %21, %19, %cst_22 {dimension_numbers = #tpu.dot_dimension_numbers<[1], [0], [0], [1], [0, 0, 1, 1], [], []>} : vector<4x4xf32>, vector<4x256xf32>, vector<4x256xf32> -> vector<4x256xf32>
    %23 = arith.addf %18, %22 : vector<4x256xf32>
    %c0_23 = arith.constant 0 : index
    %c113 = arith.constant 113 : index
    %24 = vector.load %arg6[%c0_23, %c113] : memref<4x512xf32, #tpu.memory_space<vmem>>, vector<4x256xf32>
    %25 = arith.mulf %24, %5 : vector<4x256xf32>
    %c2 = arith.constant 2 : index
    %c0_24 = arith.constant 0 : index
    %c0_25 = arith.constant 0 : index
    %26 = vector.load %arg2[%c2, %c0_24, %c0_25] : memref<18x4x4xf32, #tpu.memory_space<vmem>>, vector<1x4x4xf32>
    %27 = vector.shape_cast %26 : vector<1x4x4xf32> to vector<4x4xf32>
    %cst_26 = arith.constant dense<0.000000e+00> : vector<4x256xf32>
    %28 = tpu.matmul %27, %25, %cst_26 {dimension_numbers = #tpu.dot_dimension_numbers<[1], [0], [0], [1], [0, 0, 1, 1], [], []>} : vector<4x4xf32>, vector<4x256xf32>, vector<4x256xf32> -> vector<4x256xf32>
    %29 = arith.addf %23, %28 : vector<4x256xf32>
    %c0_27 = arith.constant 0 : index
    %c127 = arith.constant 127 : index
    %30 = vector.load %arg6[%c0_27, %c127] : memref<4x512xf32, #tpu.memory_space<vmem>>, vector<4x256xf32>
    %31 = arith.mulf %30, %3 : vector<4x256xf32>
    %c3 = arith.constant 3 : index
    %c0_28 = arith.constant 0 : index
    %c0_29 = arith.constant 0 : index
    %32 = vector.load %arg2[%c3, %c0_28, %c0_29] : memref<18x4x4xf32, #tpu.memory_space<vmem>>, vector<1x4x4xf32>
    %33 = vector.shape_cast %32 : vector<1x4x4xf32> to vector<4x4xf32>
    %cst_30 = arith.constant dense<0.000000e+00> : vector<4x256xf32>
    %34 = tpu.matmul %33, %31, %cst_30 {dimension_numbers = #tpu.dot_dimension_numbers<[1], [0], [0], [1], [0, 0, 1, 1], [], []>} : vector<4x4xf32>, vector<4x256xf32>, vector<4x256xf32> -> vector<4x256xf32>
    %35 = arith.addf %29, %34 : vector<4x256xf32>
    %c0_31 = arith.constant 0 : index
    %c128_32 = arith.constant 128 : index
    %36 = vector.load %arg6[%c0_31, %c128_32] : memref<4x512xf32, #tpu.memory_space<vmem>>, vector<4x256xf32>
    %c4 = arith.constant 4 : index
    %c0_33 = arith.constant 0 : index
    %c0_34 = arith.constant 0 : index
    %37 = vector.load %arg2[%c4, %c0_33, %c0_34] : memref<18x4x4xf32, #tpu.memory_space<vmem>>, vector<1x4x4xf32>
    %38 = vector.shape_cast %37 : vector<1x4x4xf32> to vector<4x4xf32>
    %cst_35 = arith.constant dense<0.000000e+00> : vector<4x256xf32>
    %39 = tpu.matmul %38, %36, %cst_35 {dimension_numbers = #tpu.dot_dimension_numbers<[1], [0], [0], [1], [0, 0, 1, 1], [], []>} : vector<4x4xf32>, vector<4x256xf32>, vector<4x256xf32> -> vector<4x256xf32>
    %40 = arith.addf %35, %39 : vector<4x256xf32>
    %c0_36 = arith.constant 0 : index
    %c129 = arith.constant 129 : index
    %41 = vector.load %arg6[%c0_36, %c129] : memref<4x512xf32, #tpu.memory_space<vmem>>, vector<4x256xf32>
    %42 = arith.mulf %41, %5 : vector<4x256xf32>
    %c5 = arith.constant 5 : index
    %c0_37 = arith.constant 0 : index
    %c0_38 = arith.constant 0 : index
    %43 = vector.load %arg2[%c5, %c0_37, %c0_38] : memref<18x4x4xf32, #tpu.memory_space<vmem>>, vector<1x4x4xf32>
    %44 = vector.shape_cast %43 : vector<1x4x4xf32> to vector<4x4xf32>
    %cst_39 = arith.constant dense<0.000000e+00> : vector<4x256xf32>
    %45 = tpu.matmul %44, %42, %cst_39 {dimension_numbers = #tpu.dot_dimension_numbers<[1], [0], [0], [1], [0, 0, 1, 1], [], []>} : vector<4x4xf32>, vector<4x256xf32>, vector<4x256xf32> -> vector<4x256xf32>
    %46 = arith.addf %40, %45 : vector<4x256xf32>
    %c0_40 = arith.constant 0 : index
    %c143 = arith.constant 143 : index
    %47 = vector.load %arg6[%c0_40, %c143] : memref<4x512xf32, #tpu.memory_space<vmem>>, vector<4x256xf32>
    %48 = arith.mulf %47, %3 : vector<4x256xf32>
    %c6 = arith.constant 6 : index
    %c0_41 = arith.constant 0 : index
    %c0_42 = arith.constant 0 : index
    %49 = vector.load %arg2[%c6, %c0_41, %c0_42] : memref<18x4x4xf32, #tpu.memory_space<vmem>>, vector<1x4x4xf32>
    %50 = vector.shape_cast %49 : vector<1x4x4xf32> to vector<4x4xf32>
    %cst_43 = arith.constant dense<0.000000e+00> : vector<4x256xf32>
    %51 = tpu.matmul %50, %48, %cst_43 {dimension_numbers = #tpu.dot_dimension_numbers<[1], [0], [0], [1], [0, 0, 1, 1], [], []>} : vector<4x4xf32>, vector<4x256xf32>, vector<4x256xf32> -> vector<4x256xf32>
    %52 = arith.addf %46, %51 : vector<4x256xf32>
    %c0_44 = arith.constant 0 : index
    %c144 = arith.constant 144 : index
    %53 = vector.load %arg6[%c0_44, %c144] : memref<4x512xf32, #tpu.memory_space<vmem>>, vector<4x256xf32>
    %c7 = arith.constant 7 : index
    %c0_45 = arith.constant 0 : index
    %c0_46 = arith.constant 0 : index
    %54 = vector.load %arg2[%c7, %c0_45, %c0_46] : memref<18x4x4xf32, #tpu.memory_space<vmem>>, vector<1x4x4xf32>
    %55 = vector.shape_cast %54 : vector<1x4x4xf32> to vector<4x4xf32>
    %cst_47 = arith.constant dense<0.000000e+00> : vector<4x256xf32>
    %56 = tpu.matmul %55, %53, %cst_47 {dimension_numbers = #tpu.dot_dimension_numbers<[1], [0], [0], [1], [0, 0, 1, 1], [], []>} : vector<4x4xf32>, vector<4x256xf32>, vector<4x256xf32> -> vector<4x256xf32>
    %57 = arith.addf %52, %56 : vector<4x256xf32>
    %c0_48 = arith.constant 0 : index
    %c145 = arith.constant 145 : index
    %58 = vector.load %arg6[%c0_48, %c145] : memref<4x512xf32, #tpu.memory_space<vmem>>, vector<4x256xf32>
    %59 = arith.mulf %58, %5 : vector<4x256xf32>
    %c8 = arith.constant 8 : index
    %c0_49 = arith.constant 0 : index
    %c0_50 = arith.constant 0 : index
    %60 = vector.load %arg2[%c8, %c0_49, %c0_50] : memref<18x4x4xf32, #tpu.memory_space<vmem>>, vector<1x4x4xf32>
    %61 = vector.shape_cast %60 : vector<1x4x4xf32> to vector<4x4xf32>
    %cst_51 = arith.constant dense<0.000000e+00> : vector<4x256xf32>
    %62 = tpu.matmul %61, %59, %cst_51 {dimension_numbers = #tpu.dot_dimension_numbers<[1], [0], [0], [1], [0, 0, 1, 1], [], []>} : vector<4x4xf32>, vector<4x256xf32>, vector<4x256xf32> -> vector<4x256xf32>
    %63 = arith.addf %57, %62 : vector<4x256xf32>
    %cst_52 = arith.constant 0.000000e+00 : f32
    %64 = vector.broadcast %cst_52 : f32 to vector<4x256xf32>
    %65 = arith.maximumf %63, %64 : vector<4x256xf32>
    %c0_53 = arith.constant 0 : index
    %c128_54 = arith.constant 128 : index
    %66 = vector.load %arg6[%c0_53, %c128_54] : memref<4x512xf32, #tpu.memory_space<vmem>>, vector<4x256xf32>
    tpu.vector_store %arg6[%c0_53, %c128_54], %65 {strides = array<i32>} : memref<4x512xf32, #tpu.memory_space<vmem>>, vector<4x256xf32>,
    %c1_55 = arith.constant 1 : index
    %c0_56 = arith.constant 0 : index
    %c0_57 = arith.constant 0 : index
    %67 = vector.load %arg3[%c1_55, %c0_56, %c0_57] : memref<2x4x1xf32, #tpu.memory_space<vmem>>, vector<1x4x1xf32>
    %68 = vector.shape_cast %67 : vector<1x4x1xf32> to vector<4x1xf32>
    %69 = vector.shape_cast %68 : vector<4x1xf32> to vector<4x1xf32>
    %70 = vector.broadcast %69 : vector<4x1xf32> to vector<4x256xf32>
    %c0_58 = arith.constant 0 : index
    %c111_59 = arith.constant 111 : index
    %71 = vector.load %arg6[%c0_58, %c111_59] : memref<4x512xf32, #tpu.memory_space<vmem>>, vector<4x256xf32>
    %72 = arith.mulf %71, %3 : vector<4x256xf32>
    %c9 = arith.constant 9 : index
    %c0_60 = arith.constant 0 : index
    %c0_61 = arith.constant 0 : index
    %73 = vector.load %arg2[%c9, %c0_60, %c0_61] : memref<18x4x4xf32, #tpu.memory_space<vmem>>, vector<1x4x4xf32>
    %74 = vector.shape_cast %73 : vector<1x4x4xf32> to vector<4x4xf32>
    %cst_62 = arith.constant dense<0.000000e+00> : vector<4x256xf32>
    %75 = tpu.matmul %74, %72, %cst_62 {dimension_numbers = #tpu.dot_dimension_numbers<[1], [0], [0], [1], [0, 0, 1, 1], [], []>} : vector<4x4xf32>, vector<4x256xf32>, vector<4x256xf32> -> vector<4x256xf32>
    %76 = arith.addf %70, %75 : vector<4x256xf32>
    %c0_63 = arith.constant 0 : index
    %c112_64 = arith.constant 112 : index
    %77 = vector.load %arg6[%c0_63, %c112_64] : memref<4x512xf32, #tpu.memory_space<vmem>>, vector<4x256xf32>
    %c10 = arith.constant 10 : index
    %c0_65 = arith.constant 0 : index
    %c0_66 = arith.constant 0 : index
    %78 = vector.load %arg2[%c10, %c0_65, %c0_66] : memref<18x4x4xf32, #tpu.memory_space<vmem>>, vector<1x4x4xf32>
    %79 = vector.shape_cast %78 : vector<1x4x4xf32> to vector<4x4xf32>
    %cst_67 = arith.constant dense<0.000000e+00> : vector<4x256xf32>
    %80 = tpu.matmul %79, %77, %cst_67 {dimension_numbers = #tpu.dot_dimension_numbers<[1], [0], [0], [1], [0, 0, 1, 1], [], []>} : vector<4x4xf32>, vector<4x256xf32>, vector<4x256xf32> -> vector<4x256xf32>
    %81 = arith.addf %76, %80 : vector<4x256xf32>
    %c0_68 = arith.constant 0 : index
    %c113_69 = arith.constant 113 : index
    %82 = vector.load %arg6[%c0_68, %c113_69] : memref<4x512xf32, #tpu.memory_space<vmem>>, vector<4x256xf32>
    %83 = arith.mulf %82, %5 : vector<4x256xf32>
    %c11 = arith.constant 11 : index
    %c0_70 = arith.constant 0 : index
    %c0_71 = arith.constant 0 : index
    %84 = vector.load %arg2[%c11, %c0_70, %c0_71] : memref<18x4x4xf32, #tpu.memory_space<vmem>>, vector<1x4x4xf32>
    %85 = vector.shape_cast %84 : vector<1x4x4xf32> to vector<4x4xf32>
    %cst_72 = arith.constant dense<0.000000e+00> : vector<4x256xf32>
    %86 = tpu.matmul %85, %83, %cst_72 {dimension_numbers = #tpu.dot_dimension_numbers<[1], [0], [0], [1], [0, 0, 1, 1], [], []>} : vector<4x4xf32>, vector<4x256xf32>, vector<4x256xf32> -> vector<4x256xf32>
    %87 = arith.addf %81, %86 : vector<4x256xf32>
    %c0_73 = arith.constant 0 : index
    %c127_74 = arith.constant 127 : index
    %88 = vector.load %arg6[%c0_73, %c127_74] : memref<4x512xf32, #tpu.memory_space<vmem>>, vector<4x256xf32>
    %89 = arith.mulf %88, %3 : vector<4x256xf32>
    %c12 = arith.constant 12 : index
    %c0_75 = arith.constant 0 : index
    %c0_76 = arith.constant 0 : index
    %90 = vector.load %arg2[%c12, %c0_75, %c0_76] : memref<18x4x4xf32, #tpu.memory_space<vmem>>, vector<1x4x4xf32>
    %91 = vector.shape_cast %90 : vector<1x4x4xf32> to vector<4x4xf32>
    %cst_77 = arith.constant dense<0.000000e+00> : vector<4x256xf32>
    %92 = tpu.matmul %91, %89, %cst_77 {dimension_numbers = #tpu.dot_dimension_numbers<[1], [0], [0], [1], [0, 0, 1, 1], [], []>} : vector<4x4xf32>, vector<4x256xf32>, vector<4x256xf32> -> vector<4x256xf32>
    %93 = arith.addf %87, %92 : vector<4x256xf32>
    %c0_78 = arith.constant 0 : index
    %c128_79 = arith.constant 128 : index
    %94 = vector.load %arg6[%c0_78, %c128_79] : memref<4x512xf32, #tpu.memory_space<vmem>>, vector<4x256xf32>
    %c13 = arith.constant 13 : index
    %c0_80 = arith.constant 0 : index
    %c0_81 = arith.constant 0 : index
    %95 = vector.load %arg2[%c13, %c0_80, %c0_81] : memref<18x4x4xf32, #tpu.memory_space<vmem>>, vector<1x4x4xf32>
    %96 = vector.shape_cast %95 : vector<1x4x4xf32> to vector<4x4xf32>
    %cst_82 = arith.constant dense<0.000000e+00> : vector<4x256xf32>
    %97 = tpu.matmul %96, %94, %cst_82 {dimension_numbers = #tpu.dot_dimension_numbers<[1], [0], [0], [1], [0, 0, 1, 1], [], []>} : vector<4x4xf32>, vector<4x256xf32>, vector<4x256xf32> -> vector<4x256xf32>
    %98 = arith.addf %93, %97 : vector<4x256xf32>
    %c0_83 = arith.constant 0 : index
    %c129_84 = arith.constant 129 : index
    %99 = vector.load %arg6[%c0_83, %c129_84] : memref<4x512xf32, #tpu.memory_space<vmem>>, vector<4x256xf32>
    %100 = arith.mulf %99, %5 : vector<4x256xf32>
    %c14 = arith.constant 14 : index
    %c0_85 = arith.constant 0 : index
    %c0_86 = arith.constant 0 : index
    %101 = vector.load %arg2[%c14, %c0_85, %c0_86] : memref<18x4x4xf32, #tpu.memory_space<vmem>>, vector<1x4x4xf32>
    %102 = vector.shape_cast %101 : vector<1x4x4xf32> to vector<4x4xf32>
    %cst_87 = arith.constant dense<0.000000e+00> : vector<4x256xf32>
    %103 = tpu.matmul %102, %100, %cst_87 {dimension_numbers = #tpu.dot_dimension_numbers<[1], [0], [0], [1], [0, 0, 1, 1], [], []>} : vector<4x4xf32>, vector<4x256xf32>, vector<4x256xf32> -> vector<4x256xf32>
    %104 = arith.addf %98, %103 : vector<4x256xf32>
    %c0_88 = arith.constant 0 : index
    %c143_89 = arith.constant 143 : index
    %105 = vector.load %arg6[%c0_88, %c143_89] : memref<4x512xf32, #tpu.memory_space<vmem>>, vector<4x256xf32>
    %106 = arith.mulf %105, %3 : vector<4x256xf32>
    %c15 = arith.constant 15 : index
    %c0_90 = arith.constant 0 : index
    %c0_91 = arith.constant 0 : index
    %107 = vector.load %arg2[%c15, %c0_90, %c0_91] : memref<18x4x4xf32, #tpu.memory_space<vmem>>, vector<1x4x4xf32>
    %108 = vector.shape_cast %107 : vector<1x4x4xf32> to vector<4x4xf32>
    %cst_92 = arith.constant dense<0.000000e+00> : vector<4x256xf32>
    %109 = tpu.matmul %108, %106, %cst_92 {dimension_numbers = #tpu.dot_dimension_numbers<[1], [0], [0], [1], [0, 0, 1, 1], [], []>} : vector<4x4xf32>, vector<4x256xf32>, vector<4x256xf32> -> vector<4x256xf32>
    %110 = arith.addf %104, %109 : vector<4x256xf32>
    %c0_93 = arith.constant 0 : index
    %c144_94 = arith.constant 144 : index
    %111 = vector.load %arg6[%c0_93, %c144_94] : memref<4x512xf32, #tpu.memory_space<vmem>>, vector<4x256xf32>
    %c16 = arith.constant 16 : index
    %c0_95 = arith.constant 0 : index
    %c0_96 = arith.constant 0 : index
    %112 = vector.load %arg2[%c16, %c0_95, %c0_96] : memref<18x4x4xf32, #tpu.memory_space<vmem>>, vector<1x4x4xf32>
    %113 = vector.shape_cast %112 : vector<1x4x4xf32> to vector<4x4xf32>
    %cst_97 = arith.constant dense<0.000000e+00> : vector<4x256xf32>
    %114 = tpu.matmul %113, %111, %cst_97 {dimension_numbers = #tpu.dot_dimension_numbers<[1], [0], [0], [1], [0, 0, 1, 1], [], []>} : vector<4x4xf32>, vector<4x256xf32>, vector<4x256xf32> -> vector<4x256xf32>
    %115 = arith.addf %110, %114 : vector<4x256xf32>
    %c0_98 = arith.constant 0 : index
    %c145_99 = arith.constant 145 : index
    %116 = vector.load %arg6[%c0_98, %c145_99] : memref<4x512xf32, #tpu.memory_space<vmem>>, vector<4x256xf32>
    %117 = arith.mulf %116, %5 : vector<4x256xf32>
    %c17 = arith.constant 17 : index
    %c0_100 = arith.constant 0 : index
    %c0_101 = arith.constant 0 : index
    %118 = vector.load %arg2[%c17, %c0_100, %c0_101] : memref<18x4x4xf32, #tpu.memory_space<vmem>>, vector<1x4x4xf32>
    %119 = vector.shape_cast %118 : vector<1x4x4xf32> to vector<4x4xf32>
    %cst_102 = arith.constant dense<0.000000e+00> : vector<4x256xf32>
    %120 = tpu.matmul %119, %117, %cst_102 {dimension_numbers = #tpu.dot_dimension_numbers<[1], [0], [0], [1], [0, 0, 1, 1], [], []>} : vector<4x4xf32>, vector<4x256xf32>, vector<4x256xf32> -> vector<4x256xf32>
    %121 = arith.addf %115, %120 : vector<4x256xf32>
    %cst_103 = arith.constant 0.000000e+00 : f32
    %122 = vector.broadcast %cst_103 : f32 to vector<4x256xf32>
    %123 = arith.maximumf %121, %122 : vector<4x256xf32>
    %124 = arith.addf %1, %123 : vector<4x256xf32>
    %c0_104 = arith.constant 0 : index
    %c0_105 = arith.constant 0 : index
    %c0_106 = arith.constant 0 : index
    %125 = vector.load %arg5[%c0_104, %c0_105, %c0_106] : memref<1x4x256xf32, #tpu.memory_space<vmem>>, vector<1x4x256xf32>
    %126 = vector.shape_cast %125 : vector<1x4x256xf32> to vector<4x256xf32>
    %127 = vector.shape_cast %124 : vector<4x256xf32> to vector<1x4x256xf32>
    tpu.vector_store %arg5[%c0_104, %c0_105, %c0_106], %127 {strides = array<i32>} : memref<1x4x256xf32, #tpu.memory_space<vmem>>, vector<1x4x256xf32>,
    return
  }
  func.func @transform_0(%arg0: i32) -> (i32, i32, i32) {
    %c0_i32 = arith.constant 0 : i32
    %c0_i32_0 = arith.constant 0 : i32
    %c0_i32_1 = arith.constant 0 : i32
    return %arg0, %c0_i32, %c0_i32_0 : i32, i32, i32
  }
  func.func @transform_1(%arg0: i32) -> (i32, i32, i32) {
    %c0_i32 = arith.constant 0 : i32
    %c0_i32_0 = arith.constant 0 : i32
    %c0_i32_1 = arith.constant 0 : i32
    %c0_i32_2 = arith.constant 0 : i32
    return %c0_i32, %c0_i32_0, %c0_i32_1 : i32, i32, i32
  }
  func.func @transform_2(%arg0: i32) -> (i32, i32, i32) {
    %c0_i32 = arith.constant 0 : i32
    %c0_i32_0 = arith.constant 0 : i32
    %c0_i32_1 = arith.constant 0 : i32
    %c0_i32_2 = arith.constant 0 : i32
    return %c0_i32, %c0_i32_0, %c0_i32_1 : i32, i32, i32
  }
  func.func @transform_3(%arg0: i32) -> (i32, i32, i32) {
    %c0_i32 = arith.constant 0 : i32
    %c0_i32_0 = arith.constant 0 : i32
    %c0_i32_1 = arith.constant 0 : i32
    %c0_i32_2 = arith.constant 0 : i32
    return %c0_i32, %c0_i32_0, %c0_i32_1 : i32, i32, i32
  }
  func.func @transform_4(%arg0: i32) -> (i32, i32, i32) {
    %c0_i32 = arith.constant 0 : i32
    %c0_i32_0 = arith.constant 0 : i32
    %c0_i32_1 = arith.constant 0 : i32
    return %arg0, %c0_i32, %c0_i32_0 : i32, i32, i32
  }
}

</mosaic_0001>

<llo_original>
// kernel: tpu_custom_call.1
$region0: #{tpu_custom_call.1}
  #allocation0 [shape = 'u32[]', space=smem, size = 0x4, offset = 0x4, fixed_abs, tag = 'smem constant byte address 0x4 - core index']
  #allocation1 [shape = 'u32[144,128]{1,0:T(1,128)}', space=vmem, size = 0x12000, scoped, tag = 'internal scratch']
  #allocation2 [shape = 'f32[4,512]{1,0:T(4,128)}', space=vmem, size = 0x2000, scoped, tag = 'scratch operand']
  %s0 = inlined_call_operand.vmem [shape: f32[2,4,256], index: 0, kind: input, shape index: {}]
  %s1 = inlined_call_operand.vmem [shape: f32[18,4,4], index: 1, kind: input, shape index: {}]
  %s2 = inlined_call_operand.vmem [shape: f32[2,4,1], index: 2, kind: input, shape index: {}]
  %s3 = inlined_call_operand.vmem [shape: f32[2,4,256], index: 3, kind: input, shape index: {}]
  %s4 = inlined_call_operand.hbm [shape: f32[2,4,256], index: 4, kind: output, shape index: {}]
  %s5 = sld [smem:[#allocation0]]
  $region49: #{tpu_custom_call.1} parent=0
    _
  %s7 = ssub.s32 1, %s5
  %s8 = scalar_select 0, %s7, %s5
  $region1: #{tpu_custom_call.1} parent=0
    #allocation3 [shape = 'u8[8192]{0}', space=vmem, size = 0x2000, scoped, tag = 'output window, operand 0']
    #allocation4 [shape = 's32[2]{0}', space=sflag, size = 0x8, scoped, tag = 'scoped memory for tpu_custom_call.1']
    %9 = vsyncpa [#allocation4], 0
    %s10 = scalar_lea.sflag [#allocation4], 1
    %11 = vsyncpa %s10, 0
    loop: start=0, step=1, limit=4
    $region2: #{tpu_custom_call.1} parent=1 // loop_pre_header
      _
    $region3: #{tpu_custom_call.1} parent=1 // loop_header
      %s13 = sphi 0, %s17
      %p14 = scmp.ge.s32.totalorder %s13, 4
      %s23 = sphi 0, %s25
      %s26 = sphi 0, %s23
      %s27 = sphi 0, %s26
      %s43 = sphi 0, %s27
      %s47 = sphi 0, %s47
      %s49 = sphi 0, %s47
      %s50 = sphi 0, %s49
      %s64 = sphi 0, %s50
      %s68 = sphi 0, %s68
      %s70 = sphi 0, %s68
      %s71 = sphi 0, %s70
      %s85 = sphi 0, %s71
      %s89 = sphi 0, %s89
      %s91 = sphi 0, %s89
      %s92 = sphi 0, %s91
      %s106 = sphi 0, %s92
      %s112 = sphi 0, %s114
      %s115 = sphi 0, %s112
      %s116 = sphi 0, %s115
      %s132 = sphi 0, %s116
    $region4: #{tpu_custom_call.1} parent=1 // loop_header_branch
      %16 = sbr.rel (%p14) target = $region8
    $region5: #{tpu_custom_call.1} parent=1 // loop_body
      %s18 = ssub.s32 %s13, 1
      %s19 = ssub.s32 %s13, 2
      %s20 = sadd.s32 %s13, 1
      %s21 = ssub.s32 %s13, %s20
      %p22 = scmp.eq.s32.totalorder %s21, 0
      %s24 = sadd.s32 %s23, 1
      %s25 = scalar_select %p22, %s23, %s24
      %p28 = pneg %p22
      %p29 = scmp.eq.s32.totalorder %s13, 1
      %p30 = por %p28, %p29
      %p31 = scmp.ne.s32.totalorder %s23, %s26
      %p32 = scmp.eq.s32.totalorder %s13, 0
      %p33 = por %p31, %p32
      %p34 = scmp.ne.s32.totalorder %s23, %s26
      %p35 = scmp.eq.s32.totalorder %s18, 1
      %p36 = por %p34, %p35
      %p37 = scmp.ne.s32.totalorder %s26, %s27
      %p38 = scmp.eq.s32.totalorder %s18, 0
      %p39 = por %p37, %p38
      %p40 = scmp.ne.s32.totalorder %s26, %s27
      %p41 = scmp.eq.s32.totalorder %s19, 1
      %p42 = por %p40, %p41
      %p44 = scmp.ne.s32.totalorder %s27, %s43
      %p45 = scmp.eq.s32.totalorder %s19, 0
      %p46 = por %p44, %p45
      %s48 = sadd.s32 %s47, 1
      %p51 = scmp.eq.s32.totalorder %s13, 1
      %p52 = scmp.ne.s32.totalorder %s47, %s49
      %p53 = scmp.eq.s32.totalorder %s13, 0
      %p54 = por %p52, %p53
      %p55 = scmp.ne.s32.totalorder %s47, %s49
      %p56 = scmp.eq.s32.totalorder %s18, 1
      %p57 = por %p55, %p56
      %p58 = scmp.ne.s32.totalorder %s49, %s50
      %p59 = scmp.eq.s32.totalorder %s18, 0
      %p60 = por %p58, %p59
      %p61 = scmp.ne.s32.totalorder %s49, %s50
      %p62 = scmp.eq.s32.totalorder %s19, 1
      %p63 = por %p61, %p62
      %p65 = scmp.ne.s32.totalorder %s50, %s64
      %p66 = scmp.eq.s32.totalorder %s19, 0
      %p67 = por %p65, %p66
      %s69 = sadd.s32 %s68, 1
      %p72 = scmp.eq.s32.totalorder %s13, 1
      %p73 = scmp.ne.s32.totalorder %s68, %s70
      %p74 = scmp.eq.s32.totalorder %s13, 0
      %p75 = por %p73, %p74
      %p76 = scmp.ne.s32.totalorder %s68, %s70
      %p77 = scmp.eq.s32.totalorder %s18, 1
      %p78 = por %p76, %p77
      %p79 = scmp.ne.s32.totalorder %s70, %s71
      %p80 = scmp.eq.s32.totalorder %s18, 0
      %p81 = por %p79, %p80
      %p82 = scmp.ne.s32.totalorder %s70, %s71
      %p83 = scmp.eq.s32.totalorder %s19, 1
      %p84 = por %p82, %p83
      %p86 = scmp.ne.s32.totalorder %s71, %s85
      %p87 = scmp.eq.s32.totalorder %s19, 0
      %p88 = por %p86, %p87
      %s90 = sadd.s32 %s89, 1
      %p93 = scmp.eq.s32.totalorder %s13, 1
      %p94 = scmp.ne.s32.totalorder %s89, %s91
      %p95 = scmp.eq.s32.totalorder %s13, 0
      %p96 = por %p94, %p95
      %p97 = scmp.ne.s32.totalorder %s89, %s91
      %p98 = scmp.eq.s32.totalorder %s18, 1
      %p99 = por %p97, %p98
      %p100 = scmp.ne.s32.totalorder %s91, %s92
      %p101 = scmp.eq.s32.totalorder %s18, 0
      %p102 = por %p100, %p101
      %p103 = scmp.ne.s32.totalorder %s91, %s92
      %p104 = scmp.eq.s32.totalorder %s19, 1
      %p105 = por %p103, %p104
      %p107 = scmp.ne.s32.totalorder %s92, %s106
      %p108 = scmp.eq.s32.totalorder %s19, 0
      %p109 = por %p107, %p108
      %s110 = ssub.s32 %s13, %s20
      %p111 = scmp.eq.s32.totalorder %s110, 0
      %s113 = sadd.s32 %s112, 1
      %s114 = scalar_select %p111, %s112, %s113
      %p117 = pneg %p111
      %p118 = scmp.eq.s32.totalorder %s13, 1
      %p119 = por %p117, %p118
      %p120 = scmp.ne.s32.totalorder %s112, %s115
      %p121 = scmp.eq.s32.totalorder %s13, 0
      %p122 = por %p120, %p121
      %p123 = scmp.ne.s32.totalorder %s112, %s115
      %p124 = scmp.eq.s32.totalorder %s18, 1
      %p125 = por %p123, %p124
      %p126 = scmp.ne.s32.totalorder %s115, %s116
      %p127 = scmp.eq.s32.totalorder %s18, 0
      %p128 = por %p126, %p127
      %p129 = scmp.ne.s32.totalorder %s115, %s116
      %p130 = scmp.eq.s32.totalorder %s19, 1
      %p131 = por %p129, %p130
      %p133 = scmp.ne.s32.totalorder %s116, %s132
      %p134 = scmp.eq.s32.totalorder %s19, 0
      %p135 = por %p133, %p134
      %p136 = scmp.le.s32.totalorder 1, %s13
      %p137 = scmp.lt.s32.totalorder %s13, 3
      %p138 = pnand %p136, %p137
      %p139 = pneg %p138
      // Predicated region
      $region9: #{tpu_custom_call.1} parent=5 // pred_check
        _
      $region10: #{tpu_custom_call.1} parent=5 // pred_check_branch
        %141 = sbr.rel (%p138) target = $region12
      $region11: #{tpu_custom_call.1} parent=5 // pred_region
        %s142 = ssub.s32 %s13, 1
        // Predicated region
        $region13: #{tpu_custom_call.1} parent=11 // pred_check
          %p143 = pneg %p60
        $region14: #{tpu_custom_call.1} parent=11 // pred_check_branch
          %145 = sbr.rel (%p143) target = $region16
        $region15: #{tpu_custom_call.1} parent=11 // pred_region
          _
        $region16: #{tpu_custom_call.1} parent=11 // pred_fallthru
          _
        // Predicated region
        $region17: #{tpu_custom_call.1} parent=11 // pred_check
          %p146 = pneg %p81
        $region18: #{tpu_custom_call.1} parent=11 // pred_check_branch
          %148 = sbr.rel (%p146) target = $region20
        $region19: #{tpu_custom_call.1} parent=11 // pred_region
          _
        $region20: #{tpu_custom_call.1} parent=11 // pred_fallthru
          _
        // Predicated region
        $region21: #{tpu_custom_call.1} parent=11 // pred_check
          %p149 = pneg %p102
        $region22: #{tpu_custom_call.1} parent=11 // pred_check_branch
          %151 = sbr.rel (%p149) target = $region24
        $region23: #{tpu_custom_call.1} parent=11 // pred_region
          _
        $region24: #{tpu_custom_call.1} parent=11 // pred_fallthru
          _
      $region12: #{tpu_custom_call.1} parent=5 // pred_fallthru
        _
      %p152 = scmp.lt.s32.totalorder %s13, 2
      // Predicated region
      $region25: #{tpu_custom_call.1} parent=5 // pred_check
        %p153 = pneg %p152
      $region26: #{tpu_custom_call.1} parent=5 // pred_check_branch
        %155 = sbr.rel (%p153) target = $region28
      $region27: #{tpu_custom_call.1} parent=5 // pred_region
        // Predicated region
        $region29: #{tpu_custom_call.1} parent=27 // pred_check
          %p156 = pneg %p33
        $region30: #{tpu_custom_call.1} parent=27 // pred_check_branch
          %158 = sbr.rel (%p156) target = $region32
        $region31: #{tpu_custom_call.1} parent=27 // pred_region
          %p159 = scmp.lt.s32.totalorder %s13, 1
          %s160 = scalar_select %p159, %s13, 1
          %s161 = smul.addr %s160, 2
          %s162 = smul.addr %s161, 4
          %s163 = scalar_lea.vmem %s0, %s162
        $region32: #{tpu_custom_call.1} parent=27 // pred_fallthru
          _
      $region28: #{tpu_custom_call.1} parent=5 // pred_fallthru
        _
      %p164 = scmp.le.s32.totalorder 1, %s13
      %p165 = scmp.lt.s32.totalorder %s13, 3
      %p166 = pnand %p164, %p165
      %p167 = pneg %p166
      // Predicated region
      $region33: #{tpu_custom_call.1} parent=5 // pred_check
        _
      $region34: #{tpu_custom_call.1} parent=5 // pred_check_branch
        %169 = sbr.rel (%p166) target = $region36
      $region35: #{tpu_custom_call.1} parent=5 // pred_region
        %s170 = ssub.s32 %s13, 1
        %p171 = scmp.lt.s32.totalorder %s18, 1
        %s172 = scalar_select %p171, %s18, 1
        %s173 = smul.addr %s172, 2
        %s174 = smul.addr %s173, 4
        %s175 = scalar_lea.vmem %s0, %s174
        %p176 = pneg %p39
        %p177 = pneg %p36
        %p178 = pneg %p60
        %p179 = pneg %p57
        %p180 = pneg %p81
        %p181 = pneg %p78
        %p182 = pneg %p102
        %p183 = pneg %p99
        %p184 = pneg %p128
        %p185 = pneg %p125
        %s186 = sand.u32 %s115, 1
        %s187 = scalar_lea.sflag [#allocation4], %s186
        %s188 = sand.u32 %s115, 1
        %s189 = smul.addr %s188, 8
        %s190 = scalar_lea.vmem [#allocation3], %s189
        %p191 = scmp.lt.s32.totalorder %s18, 1
        %s192 = scalar_select %p191, %s18, 1
        %s193 = smul.addr %s192, 2
        %s194 = smul.addr %s193, 4
        %s195 = scalar_lea.vmem %s0, %s194
        %v196 = vld [vmem:[%s195] sm:$0xff]
        %v197 = vld [vmem:[%s3] sm:$0xff]
        %s198 = scalar_lea.vmem %s3, 8
        %v199 = vld [vmem:[%s198] sm:$0xff]
        %200 = vst [vmem:[#allocation2] sm:$0xff] 0.0
        %201 = vst [vmem:[#allocation2 + $0x8] sm:$0xff] 0.0
        %202 = vst [vmem:[#allocation2 + $0x4] sm:$0xff] %v196
        %v203 = vld [vmem:[%s2] sm:$0xf]
        %205 = vset.pattern.permute.xlu0 0
        %206 = vperm.xlu0 %205, %v203
        %v207 = vpop.permute.xlu0 %206
        %v209 = vld [vmem:[#allocation2] sm:$0xff]
        %v210 = vld [vmem:[#allocation2 + $0x8] sm:$0xf]
        %212 = vrot.lane.b32.xlu0 %v197, 111
        %v213 = vpop.permute.xlu0 %212
        %v214 = vrot.slane %v213, 4
        %vm215 = vcmask 908288
        %v216 = vsel %vm215, %v214, %v213
        %v219 = vmul.f32 %v209, %v216
        %v220 = vmul.f32 %v210, %v214
        %v221 = vld [vmem:[%s1] sm:$0xf]
        %v224 = vcombine.high %v219, %v219
        %225 = vrot.lane.b32.xlu0 %v219, 17
        %v226 = vpop.permute.xlu0 %225
        %227 = vrot.lane.b32.xlu0 %v224, 17
        %v228 = vpop.permute.xlu0 %227
        %229 = vrot.lane.b32.xlu0 %v220, 17
        %v230 = vpop.permute.xlu0 %229
        %vm231 = vcmask 138240
        %v232 = vsel %vm231, %v226, %v228
        %v233 = vsel %vm231, %v228, %v230
        %vm234 = vcmask 31744
        %v236 = vsel %vm234, %v221, 0
        %vm238 = vcmask 1043456
        %v239 = vsel %vm238, %v232, 0
        %v241 = vsel %vm238, %v233, 0
        %243 = vmatprep.subr.mxu0 %v241
        %244 = vmatpush1.msra.mxu0 %v239
        %245 = vmatprep.subr.mxu0 0.0
        %246 = vmatpush1.msra.mxu0 0.0
        %247 = vmatprep.subr.mxu0 0.0
        %248 = vmatpush1.msra.mxu0 0.0
        %249 = vmatprep.subr.mxu0 0.0
        %250 = vmatpush1.msra.mxu0 0.0
        %251 = vmatprep.subr.mxu0 0.0
        %252 = vmatpush1.msra.mxu0 0.0
        %253 = vmatprep.subr.mxu0 0.0
        %254 = vmatpush1.msra.mxu0 0.0
        %255 = vmatprep.subr.mxu0 0.0
        %256 = vmatpush1.msra.mxu0 0.0
        %257 = vmatprep.subr.mxu0 0.0
        %258 = vmatpush1.msra.mxu0 0.0
        %259 = vmatprep.subr.mxu0 0.0
        %260 = vmatpush1.msra.mxu0 0.0
        %261 = vmatprep.subr.mxu0 0.0
        %262 = vmatpush1.msra.mxu0 0.0
        %263 = vmatprep.subr.mxu0 0.0
        %264 = vmatpush1.msra.mxu0 0.0
        %265 = vmatprep.subr.mxu0 0.0
        %266 = vmatpush1.msra.mxu0 0.0
        %267 = vmatprep.subr.mxu0 0.0
        %268 = vmatpush1.msra.mxu0 0.0
        %269 = vmatprep.subr.mxu0 0.0
        %270 = vmatpush1.msra.mxu0 0.0
        %271 = vmatprep.subr.mxu0 0.0
        %272 = vmatpush1.msra.mxu0 0.0
        %273 = vmatprep.subr.mxu0 0.0
        %274 = vmatpush1.msra.mxu0 0.0
        %275 = vmatprep.subr.mxu0 0.0
        %276 = vmatpush1.msra.mxu0 0.0
        %277 = vmatprep.subr.mxu0 0.0
        %278 = vmatpush1.msra.mxu0 0.0
        %279 = vmatprep.subr.mxu0 0.0
        %280 = vmatpush1.msra.mxu0 0.0
        %281 = vmatprep.subr.mxu0 0.0
        %282 = vmatpush1.msra.mxu0 0.0
        %283 = vmatprep.subr.mxu0 0.0
        %284 = vmatpush1.msra.mxu0 0.0
        %285 = vmatprep.subr.mxu0 0.0
        %286 = vmatpush1.msra.mxu0 0.0
        %287 = vmatprep.subr.mxu0 0.0
        %288 = vmatpush1.msra.mxu0 0.0
        %289 = vmatprep.subr.mxu0 0.0
        %290 = vmatpush1.msra.mxu0 0.0
        %291 = vmatprep.subr.mxu0 0.0
        %292 = vmatpush1.msra.mxu0 0.0
        %293 = vmatprep.subr.mxu0 0.0
        %294 = vmatpush1.msra.mxu0 0.0
        %295 = vmatprep.subr.mxu0 0.0
        %296 = vmatpush1.msra.mxu0 0.0
        %297 = vmatprep.subr.mxu0 0.0
        %298 = vmatpush1.msra.mxu0 0.0
        %299 = vmatprep.subr.mxu0 0.0
        %300 = vmatpush1.msra.mxu0 0.0
        %301 = vmatprep.subr.mxu0 0.0
        %302 = vmatpush1.msra.mxu0 0.0
        %303 = vmatprep.subr.mxu0 0.0
        %304 = vmatpush1.msra.mxu0 0.0
        %305 = vmatprep.subr.mxu0 0.0
        %306 = vmatpush1.msra.mxu0 0.0
        %307 = vmatprep.mubr.f32.mxu0 0.0
        %308 = vmatmul.mubr.f32.gmra.mrb[0].mxu0 %v236
        %v309 = vpop.f32.mrb[0].mxu0
        %v310 = vadd.f32 0.0, %v309
        %v311 = vpop.f32.mrb[0].mxu0
        %v312 = vadd.f32 0.0, %v311
        %313 = vdwg.mxu0
        %v314 = vadd.f32 %v207, %v310
        %v315 = vadd.f32 %v207, %v312
        %v316 = vld [vmem:[#allocation2] sm:$0xff]
        %v317 = vld [vmem:[#allocation2 + $0x8] sm:$0xf]
        %s318 = scalar_lea.vmem %s1, 4
        %v319 = vld [vmem:[%s318] sm:$0xf]
        %v322 = vcombine.high %v316, %v316
        %323 = vrot.lane.b32.xlu0 %v316, 16
        %v324 = vpop.permute.xlu0 %323
        %325 = vrot.lane.b32.xlu0 %v322, 16
        %v326 = vpop.permute.xlu0 %325
        %327 = vrot.lane.b32.xlu0 %v317, 16
        %v328 = vpop.permute.xlu0 %327
        %vm329 = vcmask 130048
        %v330 = vsel %vm329, %v324, %v326
        %v331 = vsel %vm329, %v326, %v328
        %v333 = vsel %vm234, %v319, 0
        %v335 = vsel %vm238, %v330, 0
        %v337 = vsel %vm238, %v331, 0
        %339 = vmatprep.subr.mxu0 %v337
        %340 = vmatpush1.msra.mxu0 %v335
        %341 = vmatprep.subr.mxu0 0.0
        %342 = vmatpush1.msra.mxu0 0.0
        %343 = vmatprep.subr.mxu0 0.0
        %344 = vmatpush1.msra.mxu0 0.0
        %345 = vmatprep.subr.mxu0 0.0
        %346 = vmatpush1.msra.mxu0 0.0
        %347 = vmatprep.subr.mxu0 0.0
        %348 = vmatpush1.msra.mxu0 0.0
        %349 = vmatprep.subr.mxu0 0.0
        %350 = vmatpush1.msra.mxu0 0.0
        %351 = vmatprep.subr.mxu0 0.0
        %352 = vmatpush1.msra.mxu0 0.0
        %353 = vmatprep.subr.mxu0 0.0
        %354 = vmatpush1.msra.mxu0 0.0
        %355 = vmatprep.subr.mxu0 0.0
        %356 = vmatpush1.msra.mxu0 0.0
        %357 = vmatprep.subr.mxu0 0.0
        %358 = vmatpush1.msra.mxu0 0.0
        %359 = vmatprep.subr.mxu0 0.0
        %360 = vmatpush1.msra.mxu0 0.0
        %361 = vmatprep.subr.mxu0 0.0
        %362 = vmatpush1.msra.mxu0 0.0
        %363 = vmatprep.subr.mxu0 0.0
        %364 = vmatpush1.msra.mxu0 0.0
        %365 = vmatprep.subr.mxu0 0.0
        %366 = vmatpush1.msra.mxu0 0.0
        %367 = vmatprep.subr.mxu0 0.0
        %368 = vmatpush1.msra.mxu0 0.0
        %369 = vmatprep.subr.mxu0 0.0
        %370 = vmatpush1.msra.mxu0 0.0
        %371 = vmatprep.subr.mxu0 0.0
        %372 = vmatpush1.msra.mxu0 0.0
        %373 = vmatprep.subr.mxu0 0.0
        %374 = vmatpush1.msra.mxu0 0.0
        %375 = vmatprep.subr.mxu0 0.0
        %376 = vmatpush1.msra.mxu0 0.0
        %377 = vmatprep.subr.mxu0 0.0
        %378 = vmatpush1.msra.mxu0 0.0
        %379 = vmatprep.subr.mxu0 0.0
        %380 = vmatpush1.msra.mxu0 0.0
        %381 = vmatprep.subr.mxu0 0.0
        %382 = vmatpush1.msra.mxu0 0.0
        %383 = vmatprep.subr.mxu0 0.0
        %384 = vmatpush1.msra.mxu0 0.0
        %385 = vmatprep.subr.mxu0 0.0
        %386 = vmatpush1.msra.mxu0 0.0
        %387 = vmatprep.subr.mxu0 0.0
        %388 = vmatpush1.msra.mxu0 0.0
        %389 = vmatprep.subr.mxu0 0.0
        %390 = vmatpush1.msra.mxu0 0.0
        %391 = vmatprep.subr.mxu0 0.0
        %392 = vmatpush1.msra.mxu0 0.0
        %393 = vmatprep.subr.mxu0 0.0
        %394 = vmatpush1.msra.mxu0 0.0
        %395 = vmatprep.subr.mxu0 0.0
        %396 = vmatpush1.msra.mxu0 0.0
        %397 = vmatprep.subr.mxu0 0.0
        %398 = vmatpush1.msra.mxu0 0.0
        %399 = vmatprep.subr.mxu0 0.0
        %400 = vmatpush1.msra.mxu0 0.0
        %401 = vmatprep.subr.mxu0 0.0
        %402 = vmatpush1.msra.mxu0 0.0
        %403 = vmatprep.mubr.f32.mxu0 0.0
        %404 = vmatmul.mubr.f32.gmra.mrb[0].mxu0 %v333
        %v405 = vpop.f32.mrb[0].mxu0
        %v406 = vadd.f32 0.0, %v405
        %v407 = vpop.f32.mrb[0].mxu0
        %v408 = vadd.f32 0.0, %v407
        %409 = vdwg.mxu0
        %v410 = vadd.f32 %v314, %v406
        %v411 = vadd.f32 %v315, %v408
        %v412 = vld [vmem:[#allocation2] sm:$0xff]
        %v413 = vld [vmem:[#allocation2 + $0x8] sm:$0xf]
        %415 = vrot.lane.b32.xlu0 %v199, 113
        %v416 = vpop.permute.xlu0 %415
        %v417 = vrot.slane %v416, 4
        %vm418 = vcmask 924672
        %v419 = vsel %vm418, %v417, %v416
        %v422 = vmul.f32 %v412, %v419
        %v423 = vmul.f32 %v413, %v417
        %s424 = scalar_lea.vmem %s1, 8
        %v425 = vld [vmem:[%s424] sm:$0xf]
        %v428 = vcombine.high %v422, %v422
        %429 = vrot.lane.b32.xlu0 %v422, 15
        %v430 = vpop.permute.xlu0 %429
        %431 = vrot.lane.b32.xlu0 %v428, 15
        %v432 = vpop.permute.xlu0 %431
        %433 = vrot.lane.b32.xlu0 %v423, 15
        %v434 = vpop.permute.xlu0 %433
        %vm435 = vcmask 121856
        %v436 = vsel %vm435, %v430, %v432
        %v437 = vsel %vm435, %v432, %v434
        %v439 = vsel %vm234, %v425, 0
        %v441 = vsel %vm238, %v436, 0
        %v443 = vsel %vm238, %v437, 0
        %445 = vmatprep.subr.mxu0 %v443
        %446 = vmatpush1.msra.mxu0 %v441
        %447 = vmatprep.subr.mxu0 0.0
        %448 = vmatpush1.msra.mxu0 0.0
        %449 = vmatprep.subr.mxu0 0.0
        %450 = vmatpush1.msra.mxu0 0.0
        %451 = vmatprep.subr.mxu0 0.0
        %452 = vmatpush1.msra.mxu0 0.0
        %453 = vmatprep.subr.mxu0 0.0
        %454 = vmatpush1.msra.mxu0 0.0
        %455 = vmatprep.subr.mxu0 0.0
        %456 = vmatpush1.msra.mxu0 0.0
        %457 = vmatprep.subr.mxu0 0.0
        %458 = vmatpush1.msra.mxu0 0.0
        %459 = vmatprep.subr.mxu0 0.0
        %460 = vmatpush1.msra.mxu0 0.0
        %461 = vmatprep.subr.mxu0 0.0
        %462 = vmatpush1.msra.mxu0 0.0
        %463 = vmatprep.subr.mxu0 0.0
        %464 = vmatpush1.msra.mxu0 0.0
        %465 = vmatprep.subr.mxu0 0.0
        %466 = vmatpush1.msra.mxu0 0.0
        %467 = vmatprep.subr.mxu0 0.0
        %468 = vmatpush1.msra.mxu0 0.0
        %469 = vmatprep.subr.mxu0 0.0
        %470 = vmatpush1.msra.mxu0 0.0
        %471 = vmatprep.subr.mxu0 0.0
        %472 = vmatpush1.msra.mxu0 0.0
        %473 = vmatprep.subr.mxu0 0.0
        %474 = vmatpush1.msra.mxu0 0.0
        %475 = vmatprep.subr.mxu0 0.0
        %476 = vmatpush1.msra.mxu0 0.0
        %477 = vmatprep.subr.mxu0 0.0
        %478 = vmatpush1.msra.mxu0 0.0
        %479 = vmatprep.subr.mxu0 0.0
        %480 = vmatpush1.msra.mxu0 0.0
        %481 = vmatprep.subr.mxu0 0.0
        %482 = vmatpush1.msra.mxu0 0.0
        %483 = vmatprep.subr.mxu0 0.0
        %484 = vmatpush1.msra.mxu0 0.0
        %485 = vmatprep.subr.mxu0 0.0
        %486 = vmatpush1.msra.mxu0 0.0
        %487 = vmatprep.subr.mxu0 0.0
        %488 = vmatpush1.msra.mxu0 0.0
        %489 = vmatprep.subr.mxu0 0.0
        %490 = vmatpush1.msra.mxu0 0.0
        %491 = vmatprep.subr.mxu0 0.0
        %492 = vmatpush1.msra.mxu0 0.0
        %493 = vmatprep.subr.mxu0 0.0
        %494 = vmatpush1.msra.mxu0 0.0
        %495 = vmatprep.subr.mxu0 0.0
        %496 = vmatpush1.msra.mxu0 0.0
        %497 = vmatprep.subr.mxu0 0.0
        %498 = vmatpush1.msra.mxu0 0.0
        %499 = vmatprep.subr.mxu0 0.0
        %500 = vmatpush1.msra.mxu0 0.0
        %501 = vmatprep.subr.mxu0 0.0
        %502 = vmatpush1.msra.mxu0 0.0
        %503 = vmatprep.subr.mxu0 0.0
        %504 = vmatpush1.msra.mxu0 0.0
        %505 = vmatprep.subr.mxu0 0.0
        %506 = vmatpush1.msra.mxu0 0.0
        %507 = vmatprep.subr.mxu0 0.0
        %508 = vmatpush1.msra.mxu0 0.0
        %509 = vmatprep.mubr.f32.mxu0 0.0
        %510 = vmatmul.mubr.f32.gmra.mrb[0].mxu0 %v439
        %v511 = vpop.f32.mrb[0].mxu0
        %v512 = vadd.f32 0.0, %v511
        %v513 = vpop.f32.mrb[0].mxu0
        %v514 = vadd.f32 0.0, %v513
        %515 = vdwg.mxu0
        %v516 = vadd.f32 %v410, %v512
        %v517 = vadd.f32 %v411, %v514
        %v518 = vld [vmem:[#allocation2] sm:$0xff]
        %v519 = vld [vmem:[#allocation2 + $0x8] sm:$0xf]
        %520 = vrot.lane.b32.xlu0 %v197, 127
        %v521 = vpop.permute.xlu0 %520
        %v522 = vrot.slane %v521, 4
        %vm523 = vcmask 1039360
        %v524 = vsel %vm523, %v522, %v521
        %v527 = vmul.f32 %v518, %v524
        %v528 = vmul.f32 %v519, %v522
        %s529 = scalar_lea.vmem %s1, 12
        %v530 = vld [vmem:[%s529] sm:$0xf]
        %v533 = vcombine.high %v527, %v527
        %534 = vrot.lane.b32.xlu0 %v527, 1
        %v535 = vpop.permute.xlu0 %534
        %536 = vrot.lane.b32.xlu0 %v533, 1
        %v537 = vpop.permute.xlu0 %536
        %538 = vrot.lane.b32.xlu0 %v528, 1
        %v539 = vpop.permute.xlu0 %538
        %vm540 = vcmask 7168
        %v541 = vsel %vm540, %v535, %v537
        %v542 = vsel %vm540, %v537, %v539
        %v544 = vsel %vm234, %v530, 0
        %v546 = vsel %vm238, %v541, 0
        %v548 = vsel %vm238, %v542, 0
        %550 = vmatprep.subr.mxu0 %v548
        %551 = vmatpush1.msra.mxu0 %v546
        %552 = vmatprep.subr.mxu0 0.0
        %553 = vmatpush1.msra.mxu0 0.0
        %554 = vmatprep.subr.mxu0 0.0
        %555 = vmatpush1.msra.mxu0 0.0
        %556 = vmatprep.subr.mxu0 0.0
        %557 = vmatpush1.msra.mxu0 0.0
        %558 = vmatprep.subr.mxu0 0.0
        %559 = vmatpush1.msra.mxu0 0.0
        %560 = vmatprep.subr.mxu0 0.0
        %561 = vmatpush1.msra.mxu0 0.0
        %562 = vmatprep.subr.mxu0 0.0
        %563 = vmatpush1.msra.mxu0 0.0
        %564 = vmatprep.subr.mxu0 0.0
        %565 = vmatpush1.msra.mxu0 0.0
        %566 = vmatprep.subr.mxu0 0.0
        %567 = vmatpush1.msra.mxu0 0.0
        %568 = vmatprep.subr.mxu0 0.0
        %569 = vmatpush1.msra.mxu0 0.0
        %570 = vmatprep.subr.mxu0 0.0
        %571 = vmatpush1.msra.mxu0 0.0
        %572 = vmatprep.subr.mxu0 0.0
        %573 = vmatpush1.msra.mxu0 0.0
        %574 = vmatprep.subr.mxu0 0.0
        %575 = vmatpush1.msra.mxu0 0.0
        %576 = vmatprep.subr.mxu0 0.0
        %577 = vmatpush1.msra.mxu0 0.0
        %578 = vmatprep.subr.mxu0 0.0
        %579 = vmatpush1.msra.mxu0 0.0
        %580 = vmatprep.subr.mxu0 0.0
        %581 = vmatpush1.msra.mxu0 0.0
        %582 = vmatprep.subr.mxu0 0.0
        %583 = vmatpush1.msra.mxu0 0.0
        %584 = vmatprep.subr.mxu0 0.0
        %585 = vmatpush1.msra.mxu0 0.0
        %586 = vmatprep.subr.mxu0 0.0
        %587 = vmatpush1.msra.mxu0 0.0
        %588 = vmatprep.subr.mxu0 0.0
        %589 = vmatpush1.msra.mxu0 0.0
        %590 = vmatprep.subr.mxu0 0.0
        %591 = vmatpush1.msra.mxu0 0.0
        %592 = vmatprep.subr.mxu0 0.0
        %593 = vmatpush1.msra.mxu0 0.0
        %594 = vmatprep.subr.mxu0 0.0
        %595 = vmatpush1.msra.mxu0 0.0
        %596 = vmatprep.subr.mxu0 0.0
        %597 = vmatpush1.msra.mxu0 0.0
        %598 = vmatprep.subr.mxu0 0.0
        %599 = vmatpush1.msra.mxu0 0.0
        %600 = vmatprep.subr.mxu0 0.0
        %601 = vmatpush1.msra.mxu0 0.0
        %602 = vmatprep.subr.mxu0 0.0
        %603 = vmatpush1.msra.mxu0 0.0
        %604 = vmatprep.subr.mxu0 0.0
        %605 = vmatpush1.msra.mxu0 0.0
        %606 = vmatprep.subr.mxu0 0.0
        %607 = vmatpush1.msra.mxu0 0.0
        %608 = vmatprep.subr.mxu0 0.0
        %609 = vmatpush1.msra.mxu0 0.0
        %610 = vmatprep.subr.mxu0 0.0
        %611 = vmatpush1.msra.mxu0 0.0
        %612 = vmatprep.subr.mxu0 0.0
        %613 = vmatpush1.msra.mxu0 0.0
        %614 = vmatprep.mubr.f32.mxu0 0.0
        %615 = vmatmul.mubr.f32.gmra.mrb[0].mxu0 %v544
        %v616 = vpop.f32.mrb[0].mxu0
        %v617 = vadd.f32 0.0, %v616
        %v618 = vpop.f32.mrb[0].mxu0
        %v619 = vadd.f32 0.0, %v618
        %620 = vdwg.mxu0
        %v621 = vadd.f32 %v516, %v617
        %v622 = vadd.f32 %v517, %v619
        %v623 = vld [vmem:[#allocation2 + $0x4] sm:$0xff]
        %s624 = scalar_lea.vmem %s1, 16
        %v625 = vld [vmem:[%s624] sm:$0xf]
        %v627 = vcombine.high %v623, %v623
        %v629 = vsel %vm234, %v625, 0
        %v631 = vsel %vm238, %v623, 0
        %v633 = vsel %vm238, %v627, 0
        %635 = vmatprep.subr.mxu0 %v633
        %636 = vmatpush1.msra.mxu0 %v631
        %637 = vmatprep.subr.mxu0 0.0
        %638 = vmatpush1.msra.mxu0 0.0
        %639 = vmatprep.subr.mxu0 0.0
        %640 = vmatpush1.msra.mxu0 0.0
        %641 = vmatprep.subr.mxu0 0.0
        %642 = vmatpush1.msra.mxu0 0.0
        %643 = vmatprep.subr.mxu0 0.0
        %644 = vmatpush1.msra.mxu0 0.0
        %645 = vmatprep.subr.mxu0 0.0
        %646 = vmatpush1.msra.mxu0 0.0
        %647 = vmatprep.subr.mxu0 0.0
        %648 = vmatpush1.msra.mxu0 0.0
        %649 = vmatprep.subr.mxu0 0.0
        %650 = vmatpush1.msra.mxu0 0.0
        %651 = vmatprep.subr.mxu0 0.0
        %652 = vmatpush1.msra.mxu0 0.0
        %653 = vmatprep.subr.mxu0 0.0
        %654 = vmatpush1.msra.mxu0 0.0
        %655 = vmatprep.subr.mxu0 0.0
        %656 = vmatpush1.msra.mxu0 0.0
        %657 = vmatprep.subr.mxu0 0.0
        %658 = vmatpush1.msra.mxu0 0.0
        %659 = vmatprep.subr.mxu0 0.0
        %660 = vmatpush1.msra.mxu0 0.0
        %661 = vmatprep.subr.mxu0 0.0
        %662 = vmatpush1.msra.mxu0 0.0
        %663 = vmatprep.subr.mxu0 0.0
        %664 = vmatpush1.msra.mxu0 0.0
        %665 = vmatprep.subr.mxu0 0.0
        %666 = vmatpush1.msra.mxu0 0.0
        %667 = vmatprep.subr.mxu0 0.0
        %668 = vmatpush1.msra.mxu0 0.0
        %669 = vmatprep.subr.mxu0 0.0
        %670 = vmatpush1.msra.mxu0 0.0
        %671 = vmatprep.subr.mxu0 0.0
        %672 = vmatpush1.msra.mxu0 0.0
        %673 = vmatprep.subr.mxu0 0.0
        %674 = vmatpush1.msra.mxu0 0.0
        %675 = vmatprep.subr.mxu0 0.0
        %676 = vmatpush1.msra.mxu0 0.0
        %677 = vmatprep.subr.mxu0 0.0
        %678 = vmatpush1.msra.mxu0 0.0
        %679 = vmatprep.subr.mxu0 0.0
        %680 = vmatpush1.msra.mxu0 0.0
        %681 = vmatprep.subr.mxu0 0.0
        %682 = vmatpush1.msra.mxu0 0.0
        %683 = vmatprep.subr.mxu0 0.0
        %684 = vmatpush1.msra.mxu0 0.0
        %685 = vmatprep.subr.mxu0 0.0
        %686 = vmatpush1.msra.mxu0 0.0
        %687 = vmatprep.subr.mxu0 0.0
        %688 = vmatpush1.msra.mxu0 0.0
        %689 = vmatprep.subr.mxu0 0.0
        %690 = vmatpush1.msra.mxu0 0.0
        %691 = vmatprep.subr.mxu0 0.0
        %692 = vmatpush1.msra.mxu0 0.0
        %693 = vmatprep.subr.mxu0 0.0
        %694 = vmatpush1.msra.mxu0 0.0
        %695 = vmatprep.subr.mxu0 0.0
        %696 = vmatpush1.msra.mxu0 0.0
        %697 = vmatprep.subr.mxu0 0.0
        %698 = vmatpush1.msra.mxu0 0.0
        %699 = vmatprep.mubr.f32.mxu0 0.0
        %700 = vmatmul.mubr.f32.gmra.mrb[0].mxu0 %v629
        %v701 = vpop.f32.mrb[0].mxu0
        %v702 = vadd.f32 0.0, %v701
        %v703 = vpop.f32.mrb[0].mxu0
        %v704 = vadd.f32 0.0, %v703
        %705 = vdwg.mxu0
        %v706 = vadd.f32 %v621, %v702
        %v707 = vadd.f32 %v622, %v704
        %v708 = vld [vmem:[#allocation2 + $0x4] sm:$0xff]
        %v709 = vld [vmem:[#allocation2 + $0xc] sm:$0xf]
        %710 = vrot.lane.b32.xlu0 %v199, 1
        %v711 = vpop.permute.xlu0 %710
        %v712 = vrot.slane %v711, 4
        %v713 = vsel %vm540, %v712, %v711
        %v716 = vmul.f32 %v708, %v713
        %v717 = vmul.f32 %v709, %v712
        %s718 = scalar_lea.vmem %s1, 20
        %v719 = vld [vmem:[%s718] sm:$0xf]
        %v722 = vcombine.high %v716, %v716
        %723 = vrot.lane.b32.xlu0 %v716, 127
        %v724 = vpop.permute.xlu0 %723
        %725 = vrot.lane.b32.xlu0 %v722, 127
        %v726 = vpop.permute.xlu0 %725
        %727 = vrot.lane.b32.xlu0 %v717, 127
        %v728 = vpop.permute.xlu0 %727
        %v729 = vsel %vm523, %v724, %v726
        %v730 = vsel %vm523, %v726, %v728
        %v732 = vsel %vm234, %v719, 0
        %v734 = vsel %vm238, %v729, 0
        %v736 = vsel %vm238, %v730, 0
        %738 = vmatprep.subr.mxu0 %v736
        %739 = vmatpush1.msra.mxu0 %v734
        %740 = vmatprep.subr.mxu0 0.0
        %741 = vmatpush1.msra.mxu0 0.0
        %742 = vmatprep.subr.mxu0 0.0
        %743 = vmatpush1.msra.mxu0 0.0
        %744 = vmatprep.subr.mxu0 0.0
        %745 = vmatpush1.msra.mxu0 0.0
        %746 = vmatprep.subr.mxu0 0.0
        %747 = vmatpush1.msra.mxu0 0.0
        %748 = vmatprep.subr.mxu0 0.0
        %749 = vmatpush1.msra.mxu0 0.0
        %750 = vmatprep.subr.mxu0 0.0
        %751 = vmatpush1.msra.mxu0 0.0
        %752 = vmatprep.subr.mxu0 0.0
        %753 = vmatpush1.msra.mxu0 0.0
        %754 = vmatprep.subr.mxu0 0.0
        %755 = vmatpush1.msra.mxu0 0.0
        %756 = vmatprep.subr.mxu0 0.0
        %757 = vmatpush1.msra.mxu0 0.0
        %758 = vmatprep.subr.mxu0 0.0
        %759 = vmatpush1.msra.mxu0 0.0
        %760 = vmatprep.subr.mxu0 0.0
        %761 = vmatpush1.msra.mxu0 0.0
        %762 = vmatprep.subr.mxu0 0.0
        %763 = vmatpush1.msra.mxu0 0.0
        %764 = vmatprep.subr.mxu0 0.0
        %765 = vmatpush1.msra.mxu0 0.0
        %766 = vmatprep.subr.mxu0 0.0
        %767 = vmatpush1.msra.mxu0 0.0
        %768 = vmatprep.subr.mxu0 0.0
        %769 = vmatpush1.msra.mxu0 0.0
        %770 = vmatprep.subr.mxu0 0.0
        %771 = vmatpush1.msra.mxu0 0.0
        %772 = vmatprep.subr.mxu0 0.0
        %773 = vmatpush1.msra.mxu0 0.0
        %774 = vmatprep.subr.mxu0 0.0
        %775 = vmatpush1.msra.mxu0 0.0
        %776 = vmatprep.subr.mxu0 0.0
        %777 = vmatpush1.msra.mxu0 0.0
        %778 = vmatprep.subr.mxu0 0.0
        %779 = vmatpush1.msra.mxu0 0.0
        %780 = vmatprep.subr.mxu0 0.0
        %781 = vmatpush1.msra.mxu0 0.0
        %782 = vmatprep.subr.mxu0 0.0
        %783 = vmatpush1.msra.mxu0 0.0
        %784 = vmatprep.subr.mxu0 0.0
        %785 = vmatpush1.msra.mxu0 0.0
        %786 = vmatprep.subr.mxu0 0.0
        %787 = vmatpush1.msra.mxu0 0.0
        %788 = vmatprep.subr.mxu0 0.0
        %789 = vmatpush1.msra.mxu0 0.0
        %790 = vmatprep.subr.mxu0 0.0
        %791 = vmatpush1.msra.mxu0 0.0
        %792 = vmatprep.subr.mxu0 0.0
        %793 = vmatpush1.msra.mxu0 0.0
        %794 = vmatprep.subr.mxu0 0.0
        %795 = vmatpush1.msra.mxu0 0.0
        %796 = vmatprep.subr.mxu0 0.0
        %797 = vmatpush1.msra.mxu0 0.0
        %798 = vmatprep.subr.mxu0 0.0
        %799 = vmatpush1.msra.mxu0 0.0
        %800 = vmatprep.subr.mxu0 0.0
        %801 = vmatpush1.msra.mxu0 0.0
        %802 = vmatprep.mubr.f32.mxu0 0.0
        %803 = vmatmul.mubr.f32.gmra.mrb[0].mxu0 %v732
        %v804 = vpop.f32.mrb[0].mxu0
        %v805 = vadd.f32 0.0, %v804
        %v806 = vpop.f32.mrb[0].mxu0
        %v807 = vadd.f32 0.0, %v806
        %808 = vdwg.mxu0
        %v809 = vadd.f32 %v706, %v805
        %v810 = vadd.f32 %v707, %v807
        %v811 = vld [vmem:[#allocation2 + $0x4] sm:$0xff]
        %v812 = vld [vmem:[#allocation2 + $0xc] sm:$0xf]
        %813 = vrot.lane.b32.xlu0 %v197, 15
        %v814 = vpop.permute.xlu0 %813
        %v815 = vrot.slane %v814, 4
        %v816 = vsel %vm435, %v815, %v814
        %v819 = vmul.f32 %v811, %v816
        %v820 = vmul.f32 %v812, %v815
        %s821 = scalar_lea.vmem %s1, 24
        %v822 = vld [vmem:[%s821] sm:$0xf]
        %v825 = vcombine.high %v819, %v819
        %826 = vrot.lane.b32.xlu0 %v819, 113
        %v827 = vpop.permute.xlu0 %826
        %828 = vrot.lane.b32.xlu0 %v825, 113
        %v829 = vpop.permute.xlu0 %828
        %830 = vrot.lane.b32.xlu0 %v820, 113
        %v831 = vpop.permute.xlu0 %830
        %v832 = vsel %vm418, %v827, %v829
        %v833 = vsel %vm418, %v829, %v831
        %v835 = vsel %vm234, %v822, 0
        %v837 = vsel %vm238, %v832, 0
        %v839 = vsel %vm238, %v833, 0
        %841 = vmatprep.subr.mxu0 %v839
        %842 = vmatpush1.msra.mxu0 %v837
        %843 = vmatprep.subr.mxu0 0.0
        %844 = vmatpush1.msra.mxu0 0.0
        %845 = vmatprep.subr.mxu0 0.0
        %846 = vmatpush1.msra.mxu0 0.0
        %847 = vmatprep.subr.mxu0 0.0
        %848 = vmatpush1.msra.mxu0 0.0
        %849 = vmatprep.subr.mxu0 0.0
        %850 = vmatpush1.msra.mxu0 0.0
        %851 = vmatprep.subr.mxu0 0.0
        %852 = vmatpush1.msra.mxu0 0.0
        %853 = vmatprep.subr.mxu0 0.0
        %854 = vmatpush1.msra.mxu0 0.0
        %855 = vmatprep.subr.mxu0 0.0
        %856 = vmatpush1.msra.mxu0 0.0
        %857 = vmatprep.subr.mxu0 0.0
        %858 = vmatpush1.msra.mxu0 0.0
        %859 = vmatprep.subr.mxu0 0.0
        %860 = vmatpush1.msra.mxu0 0.0
        %861 = vmatprep.subr.mxu0 0.0
        %862 = vmatpush1.msra.mxu0 0.0
        %863 = vmatprep.subr.mxu0 0.0
        %864 = vmatpush1.msra.mxu0 0.0
        %865 = vmatprep.subr.mxu0 0.0
        %866 = vmatpush1.msra.mxu0 0.0
        %867 = vmatprep.subr.mxu0 0.0
        %868 = vmatpush1.msra.mxu0 0.0
        %869 = vmatprep.subr.mxu0 0.0
        %870 = vmatpush1.msra.mxu0 0.0
        %871 = vmatprep.subr.mxu0 0.0
        %872 = vmatpush1.msra.mxu0 0.0
        %873 = vmatprep.subr.mxu0 0.0
        %874 = vmatpush1.msra.mxu0 0.0
        %875 = vmatprep.subr.mxu0 0.0
        %876 = vmatpush1.msra.mxu0 0.0
        %877 = vmatprep.subr.mxu0 0.0
        %878 = vmatpush1.msra.mxu0 0.0
        %879 = vmatprep.subr.mxu0 0.0
        %880 = vmatpush1.msra.mxu0 0.0
        %881 = vmatprep.subr.mxu0 0.0
        %882 = vmatpush1.msra.mxu0 0.0
        %883 = vmatprep.subr.mxu0 0.0
        %884 = vmatpush1.msra.mxu0 0.0
        %885 = vmatprep.subr.mxu0 0.0
        %886 = vmatpush1.msra.mxu0 0.0
        %887 = vmatprep.subr.mxu0 0.0
        %888 = vmatpush1.msra.mxu0 0.0
        %889 = vmatprep.subr.mxu0 0.0
        %890 = vmatpush1.msra.mxu0 0.0
        %891 = vmatprep.subr.mxu0 0.0
        %892 = vmatpush1.msra.mxu0 0.0
        %893 = vmatprep.subr.mxu0 0.0
        %894 = vmatpush1.msra.mxu0 0.0
        %895 = vmatprep.subr.mxu0 0.0
        %896 = vmatpush1.msra.mxu0 0.0
        %897 = vmatprep.subr.mxu0 0.0
        %898 = vmatpush1.msra.mxu0 0.0
        %899 = vmatprep.subr.mxu0 0.0
        %900 = vmatpush1.msra.mxu0 0.0
        %901 = vmatprep.subr.mxu0 0.0
        %902 = vmatpush1.msra.mxu0 0.0
        %903 = vmatprep.subr.mxu0 0.0
        %904 = vmatpush1.msra.mxu0 0.0
        %905 = vmatprep.mubr.f32.mxu0 0.0
        %906 = vmatmul.mubr.f32.gmra.mrb[0].mxu0 %v835
        %v907 = vpop.f32.mrb[0].mxu0
        %v908 = vadd.f32 0.0, %v907
        %v909 = vpop.f32.mrb[0].mxu0
        %v910 = vadd.f32 0.0, %v909
        %911 = vdwg.mxu0
        %v912 = vadd.f32 %v809, %v908
        %v913 = vadd.f32 %v810, %v910
        %v914 = vld [vmem:[#allocation2 + $0x4] sm:$0xff]
        %v915 = vld [vmem:[#allocation2 + $0xc] sm:$0xf]
        %s916 = scalar_lea.vmem %s1, 28
        %v917 = vld [vmem:[%s916] sm:$0xf]
        %v920 = vcombine.high %v914, %v914
        %921 = vrot.lane.b32.xlu0 %v914, 112
        %v922 = vpop.permute.xlu0 %921
        %923 = vrot.lane.b32.xlu0 %v920, 112
        %v924 = vpop.permute.xlu0 %923
        %925 = vrot.lane.b32.xlu0 %v915, 112
        %v926 = vpop.permute.xlu0 %925
        %vm927 = vcmask 916480
        %v928 = vsel %vm927, %v922, %v924
        %v929 = vsel %vm927, %v924, %v926
        %v931 = vsel %vm234, %v917, 0
        %v933 = vsel %vm238, %v928, 0
        %v935 = vsel %vm238, %v929, 0
        %937 = vmatprep.subr.mxu0 %v935
        %938 = vmatpush1.msra.mxu0 %v933
        %939 = vmatprep.subr.mxu0 0.0
        %940 = vmatpush1.msra.mxu0 0.0
        %941 = vmatprep.subr.mxu0 0.0
        %942 = vmatpush1.msra.mxu0 0.0
        %943 = vmatprep.subr.mxu0 0.0
        %944 = vmatpush1.msra.mxu0 0.0
        %945 = vmatprep.subr.mxu0 0.0
        %946 = vmatpush1.msra.mxu0 0.0
        %947 = vmatprep.subr.mxu0 0.0
        %948 = vmatpush1.msra.mxu0 0.0
        %949 = vmatprep.subr.mxu0 0.0
        %950 = vmatpush1.msra.mxu0 0.0
        %951 = vmatprep.subr.mxu0 0.0
        %952 = vmatpush1.msra.mxu0 0.0
        %953 = vmatprep.subr.mxu0 0.0
        %954 = vmatpush1.msra.mxu0 0.0
        %955 = vmatprep.subr.mxu0 0.0
        %956 = vmatpush1.msra.mxu0 0.0
        %957 = vmatprep.subr.mxu0 0.0
        %958 = vmatpush1.msra.mxu0 0.0
        %959 = vmatprep.subr.mxu0 0.0
        %960 = vmatpush1.msra.mxu0 0.0
        %961 = vmatprep.subr.mxu0 0.0
        %962 = vmatpush1.msra.mxu0 0.0
        %963 = vmatprep.subr.mxu0 0.0
        %964 = vmatpush1.msra.mxu0 0.0
        %965 = vmatprep.subr.mxu0 0.0
        %966 = vmatpush1.msra.mxu0 0.0
        %967 = vmatprep.subr.mxu0 0.0
        %968 = vmatpush1.msra.mxu0 0.0
        %969 = vmatprep.subr.mxu0 0.0
        %970 = vmatpush1.msra.mxu0 0.0
        %971 = vmatprep.subr.mxu0 0.0
        %972 = vmatpush1.msra.mxu0 0.0
        %973 = vmatprep.subr.mxu0 0.0
        %974 = vmatpush1.msra.mxu0 0.0
        %975 = vmatprep.subr.mxu0 0.0
        %976 = vmatpush1.msra.mxu0 0.0
        %977 = vmatprep.subr.mxu0 0.0
        %978 = vmatpush1.msra.mxu0 0.0
        %979 = vmatprep.subr.mxu0 0.0
        %980 = vmatpush1.msra.mxu0 0.0
        %981 = vmatprep.subr.mxu0 0.0
        %982 = vmatpush1.msra.mxu0 0.0
        %983 = vmatprep.subr.mxu0 0.0
        %984 = vmatpush1.msra.mxu0 0.0
        %985 = vmatprep.subr.mxu0 0.0
        %986 = vmatpush1.msra.mxu0 0.0
        %987 = vmatprep.subr.mxu0 0.0
        %988 = vmatpush1.msra.mxu0 0.0
        %989 = vmatprep.subr.mxu0 0.0
        %990 = vmatpush1.msra.mxu0 0.0
        %991 = vmatprep.subr.mxu0 0.0
        %992 = vmatpush1.msra.mxu0 0.0
        %993 = vmatprep.subr.mxu0 0.0
        %994 = vmatpush1.msra.mxu0 0.0
        %995 = vmatprep.subr.mxu0 0.0
        %996 = vmatpush1.msra.mxu0 0.0
        %997 = vmatprep.subr.mxu0 0.0
        %998 = vmatpush1.msra.mxu0 0.0
        %999 = vmatprep.subr.mxu0 0.0
        %1000 = vmatpush1.msra.mxu0 0.0
        %1001 = vmatprep.mubr.f32.mxu0 0.0
        %1002 = vmatmul.mubr.f32.gmra.mrb[0].mxu0 %v931
        %v1003 = vpop.f32.mrb[0].mxu0
        %v1004 = vadd.f32 0.0, %v1003
        %v1005 = vpop.f32.mrb[0].mxu0
        %v1006 = vadd.f32 0.0, %v1005
        %1007 = vdwg.mxu0
        %v1008 = vadd.f32 %v912, %v1004
        %v1009 = vadd.f32 %v913, %v1006
        %v1010 = vld [vmem:[#allocation2 + $0x4] sm:$0xff]
        %v1011 = vld [vmem:[#allocation2 + $0xc] sm:$0xf]
        %1012 = vrot.lane.b32.xlu0 %v199, 17
        %v1013 = vpop.permute.xlu0 %1012
        %v1014 = vrot.slane %v1013, 4
        %v1015 = vsel %vm231, %v1014, %v1013
        %v1018 = vmul.f32 %v1010, %v1015
        %v1019 = vmul.f32 %v1011, %v1014
        %s1020 = scalar_lea.vmem %s1, 32
        %v1021 = vld [vmem:[%s1020] sm:$0xf]
        %v1024 = vcombine.high %v1018, %v1018
        %1025 = vrot.lane.b32.xlu0 %v1018, 111
        %v1026 = vpop.permute.xlu0 %1025
        %1027 = vrot.lane.b32.xlu0 %v1024, 111
        %v1028 = vpop.permute.xlu0 %1027
        %1029 = vrot.lane.b32.xlu0 %v1019, 111
        %v1030 = vpop.permute.xlu0 %1029
        %v1031 = vsel %vm215, %v1026, %v1028
        %v1032 = vsel %vm215, %v1028, %v1030
        %v1034 = vsel %vm234, %v1021, 0
        %v1036 = vsel %vm238, %v1031, 0
        %v1038 = vsel %vm238, %v1032, 0
        %1040 = vmatprep.subr.mxu0 %v1038
        %1041 = vmatpush1.msra.mxu0 %v1036
        %1042 = vmatprep.subr.mxu0 0.0
        %1043 = vmatpush1.msra.mxu0 0.0
        %1044 = vmatprep.subr.mxu0 0.0
        %1045 = vmatpush1.msra.mxu0 0.0
        %1046 = vmatprep.subr.mxu0 0.0
        %1047 = vmatpush1.msra.mxu0 0.0
        %1048 = vmatprep.subr.mxu0 0.0
        %1049 = vmatpush1.msra.mxu0 0.0
        %1050 = vmatprep.subr.mxu0 0.0
        %1051 = vmatpush1.msra.mxu0 0.0
        %1052 = vmatprep.subr.mxu0 0.0
        %1053 = vmatpush1.msra.mxu0 0.0
        %1054 = vmatprep.subr.mxu0 0.0
        %1055 = vmatpush1.msra.mxu0 0.0
        %1056 = vmatprep.subr.mxu0 0.0
        %1057 = vmatpush1.msra.mxu0 0.0
        %1058 = vmatprep.subr.mxu0 0.0
        %1059 = vmatpush1.msra.mxu0 0.0
        %1060 = vmatprep.subr.mxu0 0.0
        %1061 = vmatpush1.msra.mxu0 0.0
        %1062 = vmatprep.subr.mxu0 0.0
        %1063 = vmatpush1.msra.mxu0 0.0
        %1064 = vmatprep.subr.mxu0 0.0
        %1065 = vmatpush1.msra.mxu0 0.0
        %1066 = vmatprep.subr.mxu0 0.0
        %1067 = vmatpush1.msra.mxu0 0.0
        %1068 = vmatprep.subr.mxu0 0.0
        %1069 = vmatpush1.msra.mxu0 0.0
        %1070 = vmatprep.subr.mxu0 0.0
        %1071 = vmatpush1.msra.mxu0 0.0
        %1072 = vmatprep.subr.mxu0 0.0
        %1073 = vmatpush1.msra.mxu0 0.0
        %1074 = vmatprep.subr.mxu0 0.0
        %1075 = vmatpush1.msra.mxu0 0.0
        %1076 = vmatprep.subr.mxu0 0.0
        %1077 = vmatpush1.msra.mxu0 0.0
        %1078 = vmatprep.subr.mxu0 0.0
        %1079 = vmatpush1.msra.mxu0 0.0
        %1080 = vmatprep.subr.mxu0 0.0
        %1081 = vmatpush1.msra.mxu0 0.0
        %1082 = vmatprep.subr.mxu0 0.0
        %1083 = vmatpush1.msra.mxu0 0.0
        %1084 = vmatprep.subr.mxu0 0.0
        %1085 = vmatpush1.msra.mxu0 0.0
        %1086 = vmatprep.subr.mxu0 0.0
        %1087 = vmatpush1.msra.mxu0 0.0
        %1088 = vmatprep.subr.mxu0 0.0
        %1089 = vmatpush1.msra.mxu0 0.0
        %1090 = vmatprep.subr.mxu0 0.0
        %1091 = vmatpush1.msra.mxu0 0.0
        %1092 = vmatprep.subr.mxu0 0.0
        %1093 = vmatpush1.msra.mxu0 0.0
        %1094 = vmatprep.subr.mxu0 0.0
        %1095 = vmatpush1.msra.mxu0 0.0
        %1096 = vmatprep.subr.mxu0 0.0
        %1097 = vmatpush1.msra.mxu0 0.0
        %1098 = vmatprep.subr.mxu0 0.0
        %1099 = vmatpush1.msra.mxu0 0.0
        %1100 = vmatprep.subr.mxu0 0.0
        %1101 = vmatpush1.msra.mxu0 0.0
        %1102 = vmatprep.subr.mxu0 0.0
        %1103 = vmatpush1.msra.mxu0 0.0
        %1104 = vmatprep.mubr.f32.mxu0 0.0
        %1105 = vmatmul.mubr.f32.gmra.mrb[0].mxu0 %v1034
        %v1106 = vpop.f32.mrb[0].mxu0
        %v1107 = vadd.f32 0.0, %v1106
        %v1108 = vpop.f32.mrb[0].mxu0
        %v1109 = vadd.f32 0.0, %v1108
        %1110 = vdwg.mxu0
        %v1111 = vadd.f32 %v1008, %v1107
        %v1112 = vadd.f32 %v1009, %v1109
        %v1113 = vmax.f32 %v1111, 0.0
        %v1114 = vmax.f32 %v1112, 0.0
        %v1117 = vcombine.low %v1113, %v1114
        %1119 = vst [vmem:[#allocation2 + $0x4] sm:$0xff] %v1117
        %s1120 = scalar_lea.vmem %s2, 4
        %v1121 = vld [vmem:[%s1120] sm:$0xf]
        %1123 = vset.pattern.permute.xlu0 0
        %1124 = vperm.xlu0 %1123, %v1121
        %v1125 = vpop.permute.xlu0 %1124
        %v1127 = vld [vmem:[#allocation2] sm:$0xff]
        %v1128 = vld [vmem:[#allocation2 + $0x8] sm:$0xf]
        %v1129 = vmul.f32 %v1127, %v216
        %v1130 = vmul.f32 %v1128, %v214
        %s1131 = scalar_lea.vmem %s1, 36
        %v1132 = vld [vmem:[%s1131] sm:$0xf]
        %v1135 = vcombine.high %v1129, %v1129
        %1136 = vrot.lane.b32.xlu0 %v1129, 17
        %v1137 = vpop.permute.xlu0 %1136
        %1138 = vrot.lane.b32.xlu0 %v1135, 17
        %v1139 = vpop.permute.xlu0 %1138
        %1140 = vrot.lane.b32.xlu0 %v1130, 17
        %v1141 = vpop.permute.xlu0 %1140
        %v1142 = vsel %vm231, %v1137, %v1139
        %v1143 = vsel %vm231, %v1139, %v1141
        %v1145 = vsel %vm234, %v1132, 0
        %v1147 = vsel %vm238, %v1142, 0
        %v1149 = vsel %vm238, %v1143, 0
        %1151 = vmatprep.subr.mxu0 %v1149
        %1152 = vmatpush1.msra.mxu0 %v1147
        %1153 = vmatprep.subr.mxu0 0.0
        %1154 = vmatpush1.msra.mxu0 0.0
        %1155 = vmatprep.subr.mxu0 0.0
        %1156 = vmatpush1.msra.mxu0 0.0
        %1157 = vmatprep.subr.mxu0 0.0
        %1158 = vmatpush1.msra.mxu0 0.0
        %1159 = vmatprep.subr.mxu0 0.0
        %1160 = vmatpush1.msra.mxu0 0.0
        %1161 = vmatprep.subr.mxu0 0.0
        %1162 = vmatpush1.msra.mxu0 0.0
        %1163 = vmatprep.subr.mxu0 0.0
        %1164 = vmatpush1.msra.mxu0 0.0
        %1165 = vmatprep.subr.mxu0 0.0
        %1166 = vmatpush1.msra.mxu0 0.0
        %1167 = vmatprep.subr.mxu0 0.0
        %1168 = vmatpush1.msra.mxu0 0.0
        %1169 = vmatprep.subr.mxu0 0.0
        %1170 = vmatpush1.msra.mxu0 0.0
        %1171 = vmatprep.subr.mxu0 0.0
        %1172 = vmatpush1.msra.mxu0 0.0
        %1173 = vmatprep.subr.mxu0 0.0
        %1174 = vmatpush1.msra.mxu0 0.0
        %1175 = vmatprep.subr.mxu0 0.0
        %1176 = vmatpush1.msra.mxu0 0.0
        %1177 = vmatprep.subr.mxu0 0.0
        %1178 = vmatpush1.msra.mxu0 0.0
        %1179 = vmatprep.subr.mxu0 0.0
        %1180 = vmatpush1.msra.mxu0 0.0
        %1181 = vmatprep.subr.mxu0 0.0
        %1182 = vmatpush1.msra.mxu0 0.0
        %1183 = vmatprep.subr.mxu0 0.0
        %1184 = vmatpush1.msra.mxu0 0.0
        %1185 = vmatprep.subr.mxu0 0.0
        %1186 = vmatpush1.msra.mxu0 0.0
        %1187 = vmatprep.subr.mxu0 0.0
        %1188 = vmatpush1.msra.mxu0 0.0
        %1189 = vmatprep.subr.mxu0 0.0
        %1190 = vmatpush1.msra.mxu0 0.0
        %1191 = vmatprep.subr.mxu0 0.0
        %1192 = vmatpush1.msra.mxu0 0.0
        %1193 = vmatprep.subr.mxu0 0.0
        %1194 = vmatpush1.msra.mxu0 0.0
        %1195 = vmatprep.subr.mxu0 0.0
        %1196 = vmatpush1.msra.mxu0 0.0
        %1197 = vmatprep.subr.mxu0 0.0
        %1198 = vmatpush1.msra.mxu0 0.0
        %1199 = vmatprep.subr.mxu0 0.0
        %1200 = vmatpush1.msra.mxu0 0.0
        %1201 = vmatprep.subr.mxu0 0.0
        %1202 = vmatpush1.msra.mxu0 0.0
        %1203 = vmatprep.subr.mxu0 0.0
        %1204 = vmatpush1.msra.mxu0 0.0
        %1205 = vmatprep.subr.mxu0 0.0
        %1206 = vmatpush1.msra.mxu0 0.0
        %1207 = vmatprep.subr.mxu0 0.0
        %1208 = vmatpush1.msra.mxu0 0.0
        %1209 = vmatprep.subr.mxu0 0.0
        %1210 = vmatpush1.msra.mxu0 0.0
        %1211 = vmatprep.subr.mxu0 0.0
        %1212 = vmatpush1.msra.mxu0 0.0
        %1213 = vmatprep.subr.mxu0 0.0
        %1214 = vmatpush1.msra.mxu0 0.0
        %1215 = vmatprep.mubr.f32.mxu0 0.0
        %1216 = vmatmul.mubr.f32.gmra.mrb[0].mxu0 %v1145
        %v1217 = vpop.f32.mrb[0].mxu0
        %v1218 = vadd.f32 0.0, %v1217
        %v1219 = vpop.f32.mrb[0].mxu0
        %v1220 = vadd.f32 0.0, %v1219
        %1221 = vdwg.mxu0
        %v1222 = vadd.f32 %v1125, %v1218
        %v1223 = vadd.f32 %v1125, %v1220
        %v1224 = vld [vmem:[#allocation2] sm:$0xff]
        %v1225 = vld [vmem:[#allocation2 + $0x8] sm:$0xf]
        %s1226 = scalar_lea.vmem %s1, 40
        %v1227 = vld [vmem:[%s1226] sm:$0xf]
        %v1230 = vcombine.high %v1224, %v1224
        %1231 = vrot.lane.b32.xlu0 %v1224, 16
        %v1232 = vpop.permute.xlu0 %1231
        %1233 = vrot.lane.b32.xlu0 %v1230, 16
        %v1234 = vpop.permute.xlu0 %1233
        %1235 = vrot.lane.b32.xlu0 %v1225, 16
        %v1236 = vpop.permute.xlu0 %1235
        %v1237 = vsel %vm329, %v1232, %v1234
        %v1238 = vsel %vm329, %v1234, %v1236
        %v1240 = vsel %vm234, %v1227, 0
        %v1242 = vsel %vm238, %v1237, 0
        %v1244 = vsel %vm238, %v1238, 0
        %1246 = vmatprep.subr.mxu0 %v1244
        %1247 = vmatpush1.msra.mxu0 %v1242
        %1248 = vmatprep.subr.mxu0 0.0
        %1249 = vmatpush1.msra.mxu0 0.0
        %1250 = vmatprep.subr.mxu0 0.0
        %1251 = vmatpush1.msra.mxu0 0.0
        %1252 = vmatprep.subr.mxu0 0.0
        %1253 = vmatpush1.msra.mxu0 0.0
        %1254 = vmatprep.subr.mxu0 0.0
        %1255 = vmatpush1.msra.mxu0 0.0
        %1256 = vmatprep.subr.mxu0 0.0
        %1257 = vmatpush1.msra.mxu0 0.0
        %1258 = vmatprep.subr.mxu0 0.0
        %1259 = vmatpush1.msra.mxu0 0.0
        %1260 = vmatprep.subr.mxu0 0.0
        %1261 = vmatpush1.msra.mxu0 0.0
        %1262 = vmatprep.subr.mxu0 0.0
        %1263 = vmatpush1.msra.mxu0 0.0
        %1264 = vmatprep.subr.mxu0 0.0
        %1265 = vmatpush1.msra.mxu0 0.0
        %1266 = vmatprep.subr.mxu0 0.0
        %1267 = vmatpush1.msra.mxu0 0.0
        %1268 = vmatprep.subr.mxu0 0.0
        %1269 = vmatpush1.msra.mxu0 0.0
        %1270 = vmatprep.subr.mxu0 0.0
        %1271 = vmatpush1.msra.mxu0 0.0
        %1272 = vmatprep.subr.mxu0 0.0
        %1273 = vmatpush1.msra.mxu0 0.0
        %1274 = vmatprep.subr.mxu0 0.0
        %1275 = vmatpush1.msra.mxu0 0.0
        %1276 = vmatprep.subr.mxu0 0.0
        %1277 = vmatpush1.msra.mxu0 0.0
        %1278 = vmatprep.subr.mxu0 0.0
        %1279 = vmatpush1.msra.mxu0 0.0
        %1280 = vmatprep.subr.mxu0 0.0
        %1281 = vmatpush1.msra.mxu0 0.0
        %1282 = vmatprep.subr.mxu0 0.0
        %1283 = vmatpush1.msra.mxu0 0.0
        %1284 = vmatprep.subr.mxu0 0.0
        %1285 = vmatpush1.msra.mxu0 0.0
        %1286 = vmatprep.subr.mxu0 0.0
        %1287 = vmatpush1.msra.mxu0 0.0
        %1288 = vmatprep.subr.mxu0 0.0
        %1289 = vmatpush1.msra.mxu0 0.0
        %1290 = vmatprep.subr.mxu0 0.0
        %1291 = vmatpush1.msra.mxu0 0.0
        %1292 = vmatprep.subr.mxu0 0.0
        %1293 = vmatpush1.msra.mxu0 0.0
        %1294 = vmatprep.subr.mxu0 0.0
        %1295 = vmatpush1.msra.mxu0 0.0
        %1296 = vmatprep.subr.mxu0 0.0
        %1297 = vmatpush1.msra.mxu0 0.0
        %1298 = vmatprep.subr.mxu0 0.0
        %1299 = vmatpush1.msra.mxu0 0.0
        %1300 = vmatprep.subr.mxu0 0.0
        %1301 = vmatpush1.msra.mxu0 0.0
        %1302 = vmatprep.subr.mxu0 0.0
        %1303 = vmatpush1.msra.mxu0 0.0
        %1304 = vmatprep.subr.mxu0 0.0
        %1305 = vmatpush1.msra.mxu0 0.0
        %1306 = vmatprep.subr.mxu0 0.0
        %1307 = vmatpush1.msra.mxu0 0.0
        %1308 = vmatprep.subr.mxu0 0.0
        %1309 = vmatpush1.msra.mxu0 0.0
        %1310 = vmatprep.mubr.f32.mxu0 0.0
        %1311 = vmatmul.mubr.f32.gmra.mrb[0].mxu0 %v1240
        %v1312 = vpop.f32.mrb[0].mxu0
        %v1313 = vadd.f32 0.0, %v1312
        %v1314 = vpop.f32.mrb[0].mxu0
        %v1315 = vadd.f32 0.0, %v1314
        %1316 = vdwg.mxu0
        %v1317 = vadd.f32 %v1222, %v1313
        %v1318 = vadd.f32 %v1223, %v1315
        %v1319 = vld [vmem:[#allocation2] sm:$0xff]
        %v1320 = vld [vmem:[#allocation2 + $0x8] sm:$0xf]
        %v1321 = vmul.f32 %v1319, %v419
        %v1322 = vmul.f32 %v1320, %v417
        %s1323 = scalar_lea.vmem %s1, 44
        %v1324 = vld [vmem:[%s1323] sm:$0xf]
        %v1327 = vcombine.high %v1321, %v1321
        %1328 = vrot.lane.b32.xlu0 %v1321, 15
        %v1329 = vpop.permute.xlu0 %1328
        %1330 = vrot.lane.b32.xlu0 %v1327, 15
        %v1331 = vpop.permute.xlu0 %1330
        %1332 = vrot.lane.b32.xlu0 %v1322, 15
        %v1333 = vpop.permute.xlu0 %1332
        %v1334 = vsel %vm435, %v1329, %v1331
        %v1335 = vsel %vm435, %v1331, %v1333
        %v1337 = vsel %vm234, %v1324, 0
        %v1339 = vsel %vm238, %v1334, 0
        %v1341 = vsel %vm238, %v1335, 0
        %1343 = vmatprep.subr.mxu0 %v1341
        %1344 = vmatpush1.msra.mxu0 %v1339
        %1345 = vmatprep.subr.mxu0 0.0
        %1346 = vmatpush1.msra.mxu0 0.0
        %1347 = vmatprep.subr.mxu0 0.0
        %1348 = vmatpush1.msra.mxu0 0.0
        %1349 = vmatprep.subr.mxu0 0.0
        %1350 = vmatpush1.msra.mxu0 0.0
        %1351 = vmatprep.subr.mxu0 0.0
        %1352 = vmatpush1.msra.mxu0 0.0
        %1353 = vmatprep.subr.mxu0 0.0
        %1354 = vmatpush1.msra.mxu0 0.0
        %1355 = vmatprep.subr.mxu0 0.0
        %1356 = vmatpush1.msra.mxu0 0.0
        %1357 = vmatprep.subr.mxu0 0.0
        %1358 = vmatpush1.msra.mxu0 0.0
        %1359 = vmatprep.subr.mxu0 0.0
        %1360 = vmatpush1.msra.mxu0 0.0
        %1361 = vmatprep.subr.mxu0 0.0
        %1362 = vmatpush1.msra.mxu0 0.0
        %1363 = vmatprep.subr.mxu0 0.0
        %1364 = vmatpush1.msra.mxu0 0.0
        %1365 = vmatprep.subr.mxu0 0.0
        %1366 = vmatpush1.msra.mxu0 0.0
        %1367 = vmatprep.subr.mxu0 0.0
        %1368 = vmatpush1.msra.mxu0 0.0
        %1369 = vmatprep.subr.mxu0 0.0
        %1370 = vmatpush1.msra.mxu0 0.0
        %1371 = vmatprep.subr.mxu0 0.0
        %1372 = vmatpush1.msra.mxu0 0.0
        %1373 = vmatprep.subr.mxu0 0.0
        %1374 = vmatpush1.msra.mxu0 0.0
        %1375 = vmatprep.subr.mxu0 0.0
        %1376 = vmatpush1.msra.mxu0 0.0
        %1377 = vmatprep.subr.mxu0 0.0
        %1378 = vmatpush1.msra.mxu0 0.0
        %1379 = vmatprep.subr.mxu0 0.0
        %1380 = vmatpush1.msra.mxu0 0.0
        %1381 = vmatprep.subr.mxu0 0.0
        %1382 = vmatpush1.msra.mxu0 0.0
        %1383 = vmatprep.subr.mxu0 0.0
        %1384 = vmatpush1.msra.mxu0 0.0
        %1385 = vmatprep.subr.mxu0 0.0
        %1386 = vmatpush1.msra.mxu0 0.0
        %1387 = vmatprep.subr.mxu0 0.0
        %1388 = vmatpush1.msra.mxu0 0.0
        %1389 = vmatprep.subr.mxu0 0.0
        %1390 = vmatpush1.msra.mxu0 0.0
        %1391 = vmatprep.subr.mxu0 0.0
        %1392 = vmatpush1.msra.mxu0 0.0
        %1393 = vmatprep.subr.mxu0 0.0
        %1394 = vmatpush1.msra.mxu0 0.0
        %1395 = vmatprep.subr.mxu0 0.0
        %1396 = vmatpush1.msra.mxu0 0.0
        %1397 = vmatprep.subr.mxu0 0.0
        %1398 = vmatpush1.msra.mxu0 0.0
        %1399 = vmatprep.subr.mxu0 0.0
        %1400 = vmatpush1.msra.mxu0 0.0
        %1401 = vmatprep.subr.mxu0 0.0
        %1402 = vmatpush1.msra.mxu0 0.0
        %1403 = vmatprep.subr.mxu0 0.0
        %1404 = vmatpush1.msra.mxu0 0.0
        %1405 = vmatprep.subr.mxu0 0.0
        %1406 = vmatpush1.msra.mxu0 0.0
        %1407 = vmatprep.mubr.f32.mxu0 0.0
        %1408 = vmatmul.mubr.f32.gmra.mrb[0].mxu0 %v1337
        %v1409 = vpop.f32.mrb[0].mxu0
        %v1410 = vadd.f32 0.0, %v1409
        %v1411 = vpop.f32.mrb[0].mxu0
        %v1412 = vadd.f32 0.0, %v1411
        %1413 = vdwg.mxu0
        %v1414 = vadd.f32 %v1317, %v1410
        %v1415 = vadd.f32 %v1318, %v1412
        %v1416 = vld [vmem:[#allocation2] sm:$0xff]
        %v1417 = vld [vmem:[#allocation2 + $0x8] sm:$0xf]
        %v1418 = vmul.f32 %v1416, %v524
        %v1419 = vmul.f32 %v1417, %v522
        %s1420 = scalar_lea.vmem %s1, 48
        %v1421 = vld [vmem:[%s1420] sm:$0xf]
        %v1424 = vcombine.high %v1418, %v1418
        %1425 = vrot.lane.b32.xlu0 %v1418, 1
        %v1426 = vpop.permute.xlu0 %1425
        %1427 = vrot.lane.b32.xlu0 %v1424, 1
        %v1428 = vpop.permute.xlu0 %1427
        %1429 = vrot.lane.b32.xlu0 %v1419, 1
        %v1430 = vpop.permute.xlu0 %1429
        %v1431 = vsel %vm540, %v1426, %v1428
        %v1432 = vsel %vm540, %v1428, %v1430
        %v1434 = vsel %vm234, %v1421, 0
        %v1436 = vsel %vm238, %v1431, 0
        %v1438 = vsel %vm238, %v1432, 0
        %1440 = vmatprep.subr.mxu0 %v1438
        %1441 = vmatpush1.msra.mxu0 %v1436
        %1442 = vmatprep.subr.mxu0 0.0
        %1443 = vmatpush1.msra.mxu0 0.0
        %1444 = vmatprep.subr.mxu0 0.0
        %1445 = vmatpush1.msra.mxu0 0.0
        %1446 = vmatprep.subr.mxu0 0.0
        %1447 = vmatpush1.msra.mxu0 0.0
        %1448 = vmatprep.subr.mxu0 0.0
        %1449 = vmatpush1.msra.mxu0 0.0
        %1450 = vmatprep.subr.mxu0 0.0
        %1451 = vmatpush1.msra.mxu0 0.0
        %1452 = vmatprep.subr.mxu0 0.0
        %1453 = vmatpush1.msra.mxu0 0.0
        %1454 = vmatprep.subr.mxu0 0.0
        %1455 = vmatpush1.msra.mxu0 0.0
        %1456 = vmatprep.subr.mxu0 0.0
        %1457 = vmatpush1.msra.mxu0 0.0
        %1458 = vmatprep.subr.mxu0 0.0
        %1459 = vmatpush1.msra.mxu0 0.0
        %1460 = vmatprep.subr.mxu0 0.0
        %1461 = vmatpush1.msra.mxu0 0.0
        %1462 = vmatprep.subr.mxu0 0.0
        %1463 = vmatpush1.msra.mxu0 0.0
        %1464 = vmatprep.subr.mxu0 0.0
        %1465 = vmatpush1.msra.mxu0 0.0
        %1466 = vmatprep.subr.mxu0 0.0
        %1467 = vmatpush1.msra.mxu0 0.0
        %1468 = vmatprep.subr.mxu0 0.0
        %1469 = vmatpush1.msra.mxu0 0.0
        %1470 = vmatprep.subr.mxu0 0.0
        %1471 = vmatpush1.msra.mxu0 0.0
        %1472 = vmatprep.subr.mxu0 0.0
        %1473 = vmatpush1.msra.mxu0 0.0
        %1474 = vmatprep.subr.mxu0 0.0
        %1475 = vmatpush1.msra.mxu0 0.0
        %1476 = vmatprep.subr.mxu0 0.0
        %1477 = vmatpush1.msra.mxu0 0.0
        %1478 = vmatprep.subr.mxu0 0.0
        %1479 = vmatpush1.msra.mxu0 0.0
        %1480 = vmatprep.subr.mxu0 0.0
        %1481 = vmatpush1.msra.mxu0 0.0
        %1482 = vmatprep.subr.mxu0 0.0
        %1483 = vmatpush1.msra.mxu0 0.0
        %1484 = vmatprep.subr.mxu0 0.0
        %1485 = vmatpush1.msra.mxu0 0.0
        %1486 = vmatprep.subr.mxu0 0.0
        %1487 = vmatpush1.msra.mxu0 0.0
        %1488 = vmatprep.subr.mxu0 0.0
        %1489 = vmatpush1.msra.mxu0 0.0
        %1490 = vmatprep.subr.mxu0 0.0
        %1491 = vmatpush1.msra.mxu0 0.0
        %1492 = vmatprep.subr.mxu0 0.0
        %1493 = vmatpush1.msra.mxu0 0.0
        %1494 = vmatprep.subr.mxu0 0.0
        %1495 = vmatpush1.msra.mxu0 0.0
        %1496 = vmatprep.subr.mxu0 0.0
        %1497 = vmatpush1.msra.mxu0 0.0
        %1498 = vmatprep.subr.mxu0 0.0
        %1499 = vmatpush1.msra.mxu0 0.0
        %1500 = vmatprep.subr.mxu0 0.0
        %1501 = vmatpush1.msra.mxu0 0.0
        %1502 = vmatprep.subr.mxu0 0.0
        %1503 = vmatpush1.msra.mxu0 0.0
        %1504 = vmatprep.mubr.f32.mxu0 0.0
        %1505 = vmatmul.mubr.f32.gmra.mrb[0].mxu0 %v1434
        %v1506 = vpop.f32.mrb[0].mxu0
        %v1507 = vadd.f32 0.0, %v1506
        %v1508 = vpop.f32.mrb[0].mxu0
        %v1509 = vadd.f32 0.0, %v1508
        %1510 = vdwg.mxu0
        %v1511 = vadd.f32 %v1414, %v1507
        %v1512 = vadd.f32 %v1415, %v1509
        %v1513 = vld [vmem:[#allocation2 + $0x4] sm:$0xff]
        %s1514 = scalar_lea.vmem %s1, 52
        %v1515 = vld [vmem:[%s1514] sm:$0xf]
        %v1517 = vcombine.high %v1513, %v1513
        %v1519 = vsel %vm234, %v1515, 0
        %v1521 = vsel %vm238, %v1513, 0
        %v1523 = vsel %vm238, %v1517, 0
        %1525 = vmatprep.subr.mxu0 %v1523
        %1526 = vmatpush1.msra.mxu0 %v1521
        %1527 = vmatprep.subr.mxu0 0.0
        %1528 = vmatpush1.msra.mxu0 0.0
        %1529 = vmatprep.subr.mxu0 0.0
        %1530 = vmatpush1.msra.mxu0 0.0
        %1531 = vmatprep.subr.mxu0 0.0
        %1532 = vmatpush1.msra.mxu0 0.0
        %1533 = vmatprep.subr.mxu0 0.0
        %1534 = vmatpush1.msra.mxu0 0.0
        %1535 = vmatprep.subr.mxu0 0.0
        %1536 = vmatpush1.msra.mxu0 0.0
        %1537 = vmatprep.subr.mxu0 0.0
        %1538 = vmatpush1.msra.mxu0 0.0
        %1539 = vmatprep.subr.mxu0 0.0
        %1540 = vmatpush1.msra.mxu0 0.0
        %1541 = vmatprep.subr.mxu0 0.0
        %1542 = vmatpush1.msra.mxu0 0.0
        %1543 = vmatprep.subr.mxu0 0.0
        %1544 = vmatpush1.msra.mxu0 0.0
        %1545 = vmatprep.subr.mxu0 0.0
        %1546 = vmatpush1.msra.mxu0 0.0
        %1547 = vmatprep.subr.mxu0 0.0
        %1548 = vmatpush1.msra.mxu0 0.0
        %1549 = vmatprep.subr.mxu0 0.0
        %1550 = vmatpush1.msra.mxu0 0.0
        %1551 = vmatprep.subr.mxu0 0.0
        %1552 = vmatpush1.msra.mxu0 0.0
        %1553 = vmatprep.subr.mxu0 0.0
        %1554 = vmatpush1.msra.mxu0 0.0
        %1555 = vmatprep.subr.mxu0 0.0
        %1556 = vmatpush1.msra.mxu0 0.0
        %1557 = vmatprep.subr.mxu0 0.0
        %1558 = vmatpush1.msra.mxu0 0.0
        %1559 = vmatprep.subr.mxu0 0.0
        %1560 = vmatpush1.msra.mxu0 0.0
        %1561 = vmatprep.subr.mxu0 0.0
        %1562 = vmatpush1.msra.mxu0 0.0
        %1563 = vmatprep.subr.mxu0 0.0
        %1564 = vmatpush1.msra.mxu0 0.0
        %1565 = vmatprep.subr.mxu0 0.0
        %1566 = vmatpush1.msra.mxu0 0.0
        %1567 = vmatprep.subr.mxu0 0.0
        %1568 = vmatpush1.msra.mxu0 0.0
        %1569 = vmatprep.subr.mxu0 0.0
        %1570 = vmatpush1.msra.mxu0 0.0
        %1571 = vmatprep.subr.mxu0 0.0
        %1572 = vmatpush1.msra.mxu0 0.0
        %1573 = vmatprep.subr.mxu0 0.0
        %1574 = vmatpush1.msra.mxu0 0.0
        %1575 = vmatprep.subr.mxu0 0.0
        %1576 = vmatpush1.msra.mxu0 0.0
        %1577 = vmatprep.subr.mxu0 0.0
        %1578 = vmatpush1.msra.mxu0 0.0
        %1579 = vmatprep.subr.mxu0 0.0
        %1580 = vmatpush1.msra.mxu0 0.0
        %1581 = vmatprep.subr.mxu0 0.0
        %1582 = vmatpush1.msra.mxu0 0.0
        %1583 = vmatprep.subr.mxu0 0.0
        %1584 = vmatpush1.msra.mxu0 0.0
        %1585 = vmatprep.subr.mxu0 0.0
        %1586 = vmatpush1.msra.mxu0 0.0
        %1587 = vmatprep.subr.mxu0 0.0
        %1588 = vmatpush1.msra.mxu0 0.0
        %1589 = vmatprep.mubr.f32.mxu0 0.0
        %1590 = vmatmul.mubr.f32.gmra.mrb[0].mxu0 %v1519
        %v1591 = vpop.f32.mrb[0].mxu0
        %v1592 = vadd.f32 0.0, %v1591
        %v1593 = vpop.f32.mrb[0].mxu0
        %v1594 = vadd.f32 0.0, %v1593
        %1595 = vdwg.mxu0
        %v1596 = vadd.f32 %v1511, %v1592
        %v1597 = vadd.f32 %v1512, %v1594
        %v1598 = vld [vmem:[#allocation2 + $0x4] sm:$0xff]
        %v1599 = vld [vmem:[#allocation2 + $0xc] sm:$0xf]
        %v1600 = vmul.f32 %v1598, %v713
        %v1601 = vmul.f32 %v1599, %v712
        %s1602 = scalar_lea.vmem %s1, 56
        %v1603 = vld [vmem:[%s1602] sm:$0xf]
        %v1606 = vcombine.high %v1600, %v1600
        %1607 = vrot.lane.b32.xlu0 %v1600, 127
        %v1608 = vpop.permute.xlu0 %1607
        %1609 = vrot.lane.b32.xlu0 %v1606, 127
        %v1610 = vpop.permute.xlu0 %1609
        %1611 = vrot.lane.b32.xlu0 %v1601, 127
        %v1612 = vpop.permute.xlu0 %1611
        %v1613 = vsel %vm523, %v1608, %v1610
        %v1614 = vsel %vm523, %v1610, %v1612
        %v1616 = vsel %vm234, %v1603, 0
        %v1618 = vsel %vm238, %v1613, 0
        %v1620 = vsel %vm238, %v1614, 0
        %1622 = vmatprep.subr.mxu0 %v1620
        %1623 = vmatpush1.msra.mxu0 %v1618
        %1624 = vmatprep.subr.mxu0 0.0
        %1625 = vmatpush1.msra.mxu0 0.0
        %1626 = vmatprep.subr.mxu0 0.0
        %1627 = vmatpush1.msra.mxu0 0.0
        %1628 = vmatprep.subr.mxu0 0.0
        %1629 = vmatpush1.msra.mxu0 0.0
        %1630 = vmatprep.subr.mxu0 0.0
        %1631 = vmatpush1.msra.mxu0 0.0
        %1632 = vmatprep.subr.mxu0 0.0
        %1633 = vmatpush1.msra.mxu0 0.0
        %1634 = vmatprep.subr.mxu0 0.0
        %1635 = vmatpush1.msra.mxu0 0.0
        %1636 = vmatprep.subr.mxu0 0.0
        %1637 = vmatpush1.msra.mxu0 0.0
        %1638 = vmatprep.subr.mxu0 0.0
        %1639 = vmatpush1.msra.mxu0 0.0
        %1640 = vmatprep.subr.mxu0 0.0
        %1641 = vmatpush1.msra.mxu0 0.0
        %1642 = vmatprep.subr.mxu0 0.0
        %1643 = vmatpush1.msra.mxu0 0.0
        %1644 = vmatprep.subr.mxu0 0.0
        %1645 = vmatpush1.msra.mxu0 0.0
        %1646 = vmatprep.subr.mxu0 0.0
        %1647 = vmatpush1.msra.mxu0 0.0
        %1648 = vmatprep.subr.mxu0 0.0
        %1649 = vmatpush1.msra.mxu0 0.0
        %1650 = vmatprep.subr.mxu0 0.0
        %1651 = vmatpush1.msra.mxu0 0.0
        %1652 = vmatprep.subr.mxu0 0.0
        %1653 = vmatpush1.msra.mxu0 0.0
        %1654 = vmatprep.subr.mxu0 0.0
        %1655 = vmatpush1.msra.mxu0 0.0
        %1656 = vmatprep.subr.mxu0 0.0
        %1657 = vmatpush1.msra.mxu0 0.0
        %1658 = vmatprep.subr.mxu0 0.0
        %1659 = vmatpush1.msra.mxu0 0.0
        %1660 = vmatprep.subr.mxu0 0.0
        %1661 = vmatpush1.msra.mxu0 0.0
        %1662 = vmatprep.subr.mxu0 0.0
        %1663 = vmatpush1.msra.mxu0 0.0
        %1664 = vmatprep.subr.mxu0 0.0
        %1665 = vmatpush1.msra.mxu0 0.0
        %1666 = vmatprep.subr.mxu0 0.0
        %1667 = vmatpush1.msra.mxu0 0.0
        %1668 = vmatprep.subr.mxu0 0.0
        %1669 = vmatpush1.msra.mxu0 0.0
        %1670 = vmatprep.subr.mxu0 0.0
        %1671 = vmatpush1.msra.mxu0 0.0
        %1672 = vmatprep.subr.mxu0 0.0
        %1673 = vmatpush1.msra.mxu0 0.0
        %1674 = vmatprep.subr.mxu0 0.0
        %1675 = vmatpush1.msra.mxu0 0.0
        %1676 = vmatprep.subr.mxu0 0.0
        %1677 = vmatpush1.msra.mxu0 0.0
        %1678 = vmatprep.subr.mxu0 0.0
        %1679 = vmatpush1.msra.mxu0 0.0
        %1680 = vmatprep.subr.mxu0 0.0
        %1681 = vmatpush1.msra.mxu0 0.0
        %1682 = vmatprep.subr.mxu0 0.0
        %1683 = vmatpush1.msra.mxu0 0.0
        %1684 = vmatprep.subr.mxu0 0.0
        %1685 = vmatpush1.msra.mxu0 0.0
        %1686 = vmatprep.mubr.f32.mxu0 0.0
        %1687 = vmatmul.mubr.f32.gmra.mrb[0].mxu0 %v1616
        %v1688 = vpop.f32.mrb[0].mxu0
        %v1689 = vadd.f32 0.0, %v1688
        %v1690 = vpop.f32.mrb[0].mxu0
        %v1691 = vadd.f32 0.0, %v1690
        %1692 = vdwg.mxu0
        %v1693 = vadd.f32 %v1596, %v1689
        %v1694 = vadd.f32 %v1597, %v1691
        %v1695 = vld [vmem:[#allocation2 + $0x4] sm:$0xff]
        %v1696 = vld [vmem:[#allocation2 + $0xc] sm:$0xf]
        %v1697 = vmul.f32 %v1695, %v816
        %v1698 = vmul.f32 %v1696, %v815
        %s1699 = scalar_lea.vmem %s1, 60
        %v1700 = vld [vmem:[%s1699] sm:$0xf]
        %v1703 = vcombine.high %v1697, %v1697
        %1704 = vrot.lane.b32.xlu0 %v1697, 113
        %v1705 = vpop.permute.xlu0 %1704
        %1706 = vrot.lane.b32.xlu0 %v1703, 113
        %v1707 = vpop.permute.xlu0 %1706
        %1708 = vrot.lane.b32.xlu0 %v1698, 113
        %v1709 = vpop.permute.xlu0 %1708
        %v1710 = vsel %vm418, %v1705, %v1707
        %v1711 = vsel %vm418, %v1707, %v1709
        %v1713 = vsel %vm234, %v1700, 0
        %v1715 = vsel %vm238, %v1710, 0
        %v1717 = vsel %vm238, %v1711, 0
        %1719 = vmatprep.subr.mxu0 %v1717
        %1720 = vmatpush1.msra.mxu0 %v1715
        %1721 = vmatprep.subr.mxu0 0.0
        %1722 = vmatpush1.msra.mxu0 0.0
        %1723 = vmatprep.subr.mxu0 0.0
        %1724 = vmatpush1.msra.mxu0 0.0
        %1725 = vmatprep.subr.mxu0 0.0
        %1726 = vmatpush1.msra.mxu0 0.0
        %1727 = vmatprep.subr.mxu0 0.0
        %1728 = vmatpush1.msra.mxu0 0.0
        %1729 = vmatprep.subr.mxu0 0.0
        %1730 = vmatpush1.msra.mxu0 0.0
        %1731 = vmatprep.subr.mxu0 0.0
        %1732 = vmatpush1.msra.mxu0 0.0
        %1733 = vmatprep.subr.mxu0 0.0
        %1734 = vmatpush1.msra.mxu0 0.0
        %1735 = vmatprep.subr.mxu0 0.0
        %1736 = vmatpush1.msra.mxu0 0.0
        %1737 = vmatprep.subr.mxu0 0.0
        %1738 = vmatpush1.msra.mxu0 0.0
        %1739 = vmatprep.subr.mxu0 0.0
        %1740 = vmatpush1.msra.mxu0 0.0
        %1741 = vmatprep.subr.mxu0 0.0
        %1742 = vmatpush1.msra.mxu0 0.0
        %1743 = vmatprep.subr.mxu0 0.0
        %1744 = vmatpush1.msra.mxu0 0.0
        %1745 = vmatprep.subr.mxu0 0.0
        %1746 = vmatpush1.msra.mxu0 0.0
        %1747 = vmatprep.subr.mxu0 0.0
        %1748 = vmatpush1.msra.mxu0 0.0
        %1749 = vmatprep.subr.mxu0 0.0
        %1750 = vmatpush1.msra.mxu0 0.0
        %1751 = vmatprep.subr.mxu0 0.0
        %1752 = vmatpush1.msra.mxu0 0.0
        %1753 = vmatprep.subr.mxu0 0.0
        %1754 = vmatpush1.msra.mxu0 0.0
        %1755 = vmatprep.subr.mxu0 0.0
        %1756 = vmatpush1.msra.mxu0 0.0
        %1757 = vmatprep.subr.mxu0 0.0
        %1758 = vmatpush1.msra.mxu0 0.0
        %1759 = vmatprep.subr.mxu0 0.0
        %1760 = vmatpush1.msra.mxu0 0.0
        %1761 = vmatprep.subr.mxu0 0.0
        %1762 = vmatpush1.msra.mxu0 0.0
        %1763 = vmatprep.subr.mxu0 0.0
        %1764 = vmatpush1.msra.mxu0 0.0
        %1765 = vmatprep.subr.mxu0 0.0
        %1766 = vmatpush1.msra.mxu0 0.0
        %1767 = vmatprep.subr.mxu0 0.0
        %1768 = vmatpush1.msra.mxu0 0.0
        %1769 = vmatprep.subr.mxu0 0.0
        %1770 = vmatpush1.msra.mxu0 0.0
        %1771 = vmatprep.subr.mxu0 0.0
        %1772 = vmatpush1.msra.mxu0 0.0
        %1773 = vmatprep.subr.mxu0 0.0
        %1774 = vmatpush1.msra.mxu0 0.0
        %1775 = vmatprep.subr.mxu0 0.0
        %1776 = vmatpush1.msra.mxu0 0.0
        %1777 = vmatprep.subr.mxu0 0.0
        %1778 = vmatpush1.msra.mxu0 0.0
        %1779 = vmatprep.subr.mxu0 0.0
        %1780 = vmatpush1.msra.mxu0 0.0
        %1781 = vmatprep.subr.mxu0 0.0
        %1782 = vmatpush1.msra.mxu0 0.0
        %1783 = vmatprep.mubr.f32.mxu0 0.0
        %1784 = vmatmul.mubr.f32.gmra.mrb[0].mxu0 %v1713
        %v1785 = vpop.f32.mrb[0].mxu0
        %v1786 = vadd.f32 0.0, %v1785
        %v1787 = vpop.f32.mrb[0].mxu0
        %v1788 = vadd.f32 0.0, %v1787
        %1789 = vdwg.mxu0
        %v1790 = vadd.f32 %v1693, %v1786
        %v1791 = vadd.f32 %v1694, %v1788
        %v1792 = vld [vmem:[#allocation2 + $0x4] sm:$0xff]
        %v1793 = vld [vmem:[#allocation2 + $0xc] sm:$0xf]
        %s1794 = scalar_lea.vmem %s1, 64
        %v1795 = vld [vmem:[%s1794] sm:$0xf]
        %v1798 = vcombine.high %v1792, %v1792
        %1799 = vrot.lane.b32.xlu0 %v1792, 112
        %v1800 = vpop.permute.xlu0 %1799
        %1801 = vrot.lane.b32.xlu0 %v1798, 112
        %v1802 = vpop.permute.xlu0 %1801
        %1803 = vrot.lane.b32.xlu0 %v1793, 112
        %v1804 = vpop.permute.xlu0 %1803
        %v1805 = vsel %vm927, %v1800, %v1802
        %v1806 = vsel %vm927, %v1802, %v1804
        %v1808 = vsel %vm234, %v1795, 0
        %v1810 = vsel %vm238, %v1805, 0
        %v1812 = vsel %vm238, %v1806, 0
        %1814 = vmatprep.subr.mxu0 %v1812
        %1815 = vmatpush1.msra.mxu0 %v1810
        %1816 = vmatprep.subr.mxu0 0.0
        %1817 = vmatpush1.msra.mxu0 0.0
        %1818 = vmatprep.subr.mxu0 0.0
        %1819 = vmatpush1.msra.mxu0 0.0
        %1820 = vmatprep.subr.mxu0 0.0
        %1821 = vmatpush1.msra.mxu0 0.0
        %1822 = vmatprep.subr.mxu0 0.0
        %1823 = vmatpush1.msra.mxu0 0.0
        %1824 = vmatprep.subr.mxu0 0.0
        %1825 = vmatpush1.msra.mxu0 0.0
        %1826 = vmatprep.subr.mxu0 0.0
        %1827 = vmatpush1.msra.mxu0 0.0
        %1828 = vmatprep.subr.mxu0 0.0
        %1829 = vmatpush1.msra.mxu0 0.0
        %1830 = vmatprep.subr.mxu0 0.0
        %1831 = vmatpush1.msra.mxu0 0.0
        %1832 = vmatprep.subr.mxu0 0.0
        %1833 = vmatpush1.msra.mxu0 0.0
        %1834 = vmatprep.subr.mxu0 0.0
        %1835 = vmatpush1.msra.mxu0 0.0
        %1836 = vmatprep.subr.mxu0 0.0
        %1837 = vmatpush1.msra.mxu0 0.0
        %1838 = vmatprep.subr.mxu0 0.0
        %1839 = vmatpush1.msra.mxu0 0.0
        %1840 = vmatprep.subr.mxu0 0.0
        %1841 = vmatpush1.msra.mxu0 0.0
        %1842 = vmatprep.subr.mxu0 0.0
        %1843 = vmatpush1.msra.mxu0 0.0
        %1844 = vmatprep.subr.mxu0 0.0
        %1845 = vmatpush1.msra.mxu0 0.0
        %1846 = vmatprep.subr.mxu0 0.0
        %1847 = vmatpush1.msra.mxu0 0.0
        %1848 = vmatprep.subr.mxu0 0.0
        %1849 = vmatpush1.msra.mxu0 0.0
        %1850 = vmatprep.subr.mxu0 0.0
        %1851 = vmatpush1.msra.mxu0 0.0
        %1852 = vmatprep.subr.mxu0 0.0
        %1853 = vmatpush1.msra.mxu0 0.0
        %1854 = vmatprep.subr.mxu0 0.0
        %1855 = vmatpush1.msra.mxu0 0.0
        %1856 = vmatprep.subr.mxu0 0.0
        %1857 = vmatpush1.msra.mxu0 0.0
        %1858 = vmatprep.subr.mxu0 0.0
        %1859 = vmatpush1.msra.mxu0 0.0
        %1860 = vmatprep.subr.mxu0 0.0
        %1861 = vmatpush1.msra.mxu0 0.0
        %1862 = vmatprep.subr.mxu0 0.0
        %1863 = vmatpush1.msra.mxu0 0.0
        %1864 = vmatprep.subr.mxu0 0.0
        %1865 = vmatpush1.msra.mxu0 0.0
        %1866 = vmatprep.subr.mxu0 0.0
        %1867 = vmatpush1.msra.mxu0 0.0
        %1868 = vmatprep.subr.mxu0 0.0
        %1869 = vmatpush1.msra.mxu0 0.0
        %1870 = vmatprep.subr.mxu0 0.0
        %1871 = vmatpush1.msra.mxu0 0.0
        %1872 = vmatprep.subr.mxu0 0.0
        %1873 = vmatpush1.msra.mxu0 0.0
        %1874 = vmatprep.subr.mxu0 0.0
        %1875 = vmatpush1.msra.mxu0 0.0
        %1876 = vmatprep.subr.mxu0 0.0
        %1877 = vmatpush1.msra.mxu0 0.0
        %1878 = vmatprep.mubr.f32.mxu0 0.0
        %1879 = vmatmul.mubr.f32.gmra.mrb[0].mxu0 %v1808
        %v1880 = vpop.f32.mrb[0].mxu0
        %v1881 = vadd.f32 0.0, %v1880
        %v1882 = vpop.f32.mrb[0].mxu0
        %v1883 = vadd.f32 0.0, %v1882
        %1884 = vdwg.mxu0
        %v1885 = vadd.f32 %v1790, %v1881
        %v1886 = vadd.f32 %v1791, %v1883
        %v1887 = vld [vmem:[#allocation2 + $0x4] sm:$0xff]
        %v1888 = vld [vmem:[#allocation2 + $0xc] sm:$0xf]
        %v1889 = vmul.f32 %v1887, %v1015
        %v1890 = vmul.f32 %v1888, %v1014
        %s1891 = scalar_lea.vmem %s1, 68
        %v1892 = vld [vmem:[%s1891] sm:$0xf]
        %v1895 = vcombine.high %v1889, %v1889
        %1896 = vrot.lane.b32.xlu0 %v1889, 111
        %v1897 = vpop.permute.xlu0 %1896
        %1898 = vrot.lane.b32.xlu0 %v1895, 111
        %v1899 = vpop.permute.xlu0 %1898
        %1900 = vrot.lane.b32.xlu0 %v1890, 111
        %v1901 = vpop.permute.xlu0 %1900
        %v1902 = vsel %vm215, %v1897, %v1899
        %v1903 = vsel %vm215, %v1899, %v1901
        %v1905 = vsel %vm234, %v1892, 0
        %v1907 = vsel %vm238, %v1902, 0
        %v1909 = vsel %vm238, %v1903, 0
        %1911 = vmatprep.subr.mxu0 %v1909
        %1912 = vmatpush1.msra.mxu0 %v1907
        %1913 = vmatprep.subr.mxu0 0.0
        %1914 = vmatpush1.msra.mxu0 0.0
        %1915 = vmatprep.subr.mxu0 0.0
        %1916 = vmatpush1.msra.mxu0 0.0
        %1917 = vmatprep.subr.mxu0 0.0
        %1918 = vmatpush1.msra.mxu0 0.0
        %1919 = vmatprep.subr.mxu0 0.0
        %1920 = vmatpush1.msra.mxu0 0.0
        %1921 = vmatprep.subr.mxu0 0.0
        %1922 = vmatpush1.msra.mxu0 0.0
        %1923 = vmatprep.subr.mxu0 0.0
        %1924 = vmatpush1.msra.mxu0 0.0
        %1925 = vmatprep.subr.mxu0 0.0
        %1926 = vmatpush1.msra.mxu0 0.0
        %1927 = vmatprep.subr.mxu0 0.0
        %1928 = vmatpush1.msra.mxu0 0.0
        %1929 = vmatprep.subr.mxu0 0.0
        %1930 = vmatpush1.msra.mxu0 0.0
        %1931 = vmatprep.subr.mxu0 0.0
        %1932 = vmatpush1.msra.mxu0 0.0
        %1933 = vmatprep.subr.mxu0 0.0
        %1934 = vmatpush1.msra.mxu0 0.0
        %1935 = vmatprep.subr.mxu0 0.0
        %1936 = vmatpush1.msra.mxu0 0.0
        %1937 = vmatprep.subr.mxu0 0.0
        %1938 = vmatpush1.msra.mxu0 0.0
        %1939 = vmatprep.subr.mxu0 0.0
        %1940 = vmatpush1.msra.mxu0 0.0
        %1941 = vmatprep.subr.mxu0 0.0
        %1942 = vmatpush1.msra.mxu0 0.0
        %1943 = vmatprep.subr.mxu0 0.0
        %1944 = vmatpush1.msra.mxu0 0.0
        %1945 = vmatprep.subr.mxu0 0.0
        %1946 = vmatpush1.msra.mxu0 0.0
        %1947 = vmatprep.subr.mxu0 0.0
        %1948 = vmatpush1.msra.mxu0 0.0
        %1949 = vmatprep.subr.mxu0 0.0
        %1950 = vmatpush1.msra.mxu0 0.0
        %1951 = vmatprep.subr.mxu0 0.0
        %1952 = vmatpush1.msra.mxu0 0.0
        %1953 = vmatprep.subr.mxu0 0.0
        %1954 = vmatpush1.msra.mxu0 0.0
        %1955 = vmatprep.subr.mxu0 0.0
        %1956 = vmatpush1.msra.mxu0 0.0
        %1957 = vmatprep.subr.mxu0 0.0
        %1958 = vmatpush1.msra.mxu0 0.0
        %1959 = vmatprep.subr.mxu0 0.0
        %1960 = vmatpush1.msra.mxu0 0.0
        %1961 = vmatprep.subr.mxu0 0.0
        %1962 = vmatpush1.msra.mxu0 0.0
        %1963 = vmatprep.subr.mxu0 0.0
        %1964 = vmatpush1.msra.mxu0 0.0
        %1965 = vmatprep.subr.mxu0 0.0
        %1966 = vmatpush1.msra.mxu0 0.0
        %1967 = vmatprep.subr.mxu0 0.0
        %1968 = vmatpush1.msra.mxu0 0.0
        %1969 = vmatprep.subr.mxu0 0.0
        %1970 = vmatpush1.msra.mxu0 0.0
        %1971 = vmatprep.subr.mxu0 0.0
        %1972 = vmatpush1.msra.mxu0 0.0
        %1973 = vmatprep.subr.mxu0 0.0
        %1974 = vmatpush1.msra.mxu0 0.0
        %1975 = vmatprep.mubr.f32.mxu0 0.0
        %1976 = vmatmul.mubr.f32.gmra.mrb[0].mxu0 %v1905
        %v1977 = vpop.f32.mrb[0].mxu0
        %v1978 = vadd.f32 0.0, %v1977
        %v1979 = vpop.f32.mrb[0].mxu0
        %v1980 = vadd.f32 0.0, %v1979
        %1981 = vdwg.mxu0
        %v1982 = vadd.f32 %v1885, %v1978
        %v1983 = vadd.f32 %v1886, %v1980
        %v1984 = vmax.f32 %v1982, 0.0
        %v1985 = vmax.f32 %v1983, 0.0
        %v1988 = vcombine.low %v1984, %v1985
        %v1990 = vadd.f32 %v196, %v1988
        %1991 = vst [vmem:[%s190] sm:$0xff] %v1990
        %s1992 = sand.u32 %s115, 1
        %s1993 = scalar_lea.sflag [#allocation4], %s1992
        %s1994 = sand.u32 %s115, 1
        %s1995 = smul.addr %s1994, 8
        %s1996 = scalar_lea.vmem [#allocation3], %s1995
        // Predicated region
        $region37: #{tpu_custom_call.1} parent=35 // pred_check
          %p1997 = pneg %p125
        $region38: #{tpu_custom_call.1} parent=35 // pred_check_branch
          %1999 = sbr.rel (%p1997) target = $region40
        $region39: #{tpu_custom_call.1} parent=35 // pred_region
          %s2001 = ssub.s32 128, 128
          %2002 = vsyncadd %s1993, %s2001
          %s2003 = smul.addr %s18, 2
          %s2004 = smul.addr %s2003, 64
          %s2005 = scalar_lea.hbm %s4, %s2004
          %s2007 = sshll.u32 %s1996, 4
          %s2008 = int_to_ptr.vmem [resolvable:$true] %s2007
          %2010 = dma.vmem_to_hbm [thread:$0]  %s2008, 128, %s2005, %s1993
        $region40: #{tpu_custom_call.1} parent=35 // pred_fallthru
          _
      $region36: #{tpu_custom_call.1} parent=5 // pred_fallthru
        _
      %p2011 = scmp.le.s32.totalorder 2, %s13
      // Predicated region
      $region41: #{tpu_custom_call.1} parent=5 // pred_check
        %p2012 = pneg %p2011
      $region42: #{tpu_custom_call.1} parent=5 // pred_check_branch
        %2014 = sbr.rel (%p2012) target = $region44
      $region43: #{tpu_custom_call.1} parent=5 // pred_region
        %s2015 = ssub.s32 %s13, 2
        // Predicated region
        $region45: #{tpu_custom_call.1} parent=43 // pred_check
          %p2016 = pneg %p131
        $region46: #{tpu_custom_call.1} parent=43 // pred_check_branch
          %2018 = sbr.rel (%p2016) target = $region48
        $region47: #{tpu_custom_call.1} parent=43 // pred_region
          %s2019 = sand.u32 %s116, 1
          %s2020 = scalar_lea.sflag [#allocation4], %s2019
          %s2021 = sand.u32 %s116, 1
          %s2022 = smul.addr %s2021, 8
          %s2023 = scalar_lea.vmem [#allocation3], %s2022
          %2024 = dma.done %s2020, 128
        $region48: #{tpu_custom_call.1} parent=43 // pred_fallthru
          _
      $region44: #{tpu_custom_call.1} parent=5 // pred_fallthru
        _
    $region6: #{tpu_custom_call.1} parent=1 // loop_footer
      %s17 = sadd.s32 1, %s13
    $region7: #{tpu_custom_call.1} parent=1 // loop_footer_branch
      %12 = sbr.rel target = $region3
    $region8: #{tpu_custom_call.1} parent=1 // loop_exit
      _
    %2025 = vsyncpa [#allocation4], 1
    %s2026 = scalar_lea.sflag [#allocation4], 1
    %2027 = vsyncpa %s2026, 1

</llo_original>
